<compile_context>
chip_gen: v7x
topology: tpu7x:2x2x1
jax: 0.10.0
libtpu: 0.0.40
codegen_flags: <defaults>
</compile_context>

<pallas_src>
import functools
import math

import jax
import jax.numpy as jnp
from jax.experimental import pallas as pl
from jax.experimental.pallas import tpu as pltpu

PRIOR_INCLUSION_PROB = 0.1  # alpha_prior; mu/sigma priors are 0 / 1 (hardcoded)


def _softplus(x):
    # Overflow-safe log1p(exp(x)).
    return jnp.where(x > 20.0, x, jnp.log1p(jnp.exp(jnp.minimum(x, 20.0))))


def _round_up(v, m):
    return ((v + m - 1) // m) * m


# ----------------------------------------------------------------------------
# Activation kernel: grid (batch tiles, out tiles, K tiles)
# ----------------------------------------------------------------------------
def _act_kernel(x_ref, wmu_ref, wrho_ref, lam_ref, bmu_ref, brho_ref, eps_ref,
                act_ref, e_acc, v_acc):
    k = pl.program_id(2)

    @pl.when(k == 0)
    def _():
        e_acc[...] = jnp.zeros_like(e_acc)
        v_acc[...] = jnp.zeros_like(v_acc)

    x = x_ref[...]                 # (tm, tk)
    w_mu = wmu_ref[...]            # (tn, tk)
    lam = lam_ref[...]             # (tn, tk)

    # Elementwise weight transform (1 exp + 1 div for sigmoid, 1 exp + 1 log1p
    # for softplus per weight element).
    alpha = 1.0 / (1.0 + jnp.exp(-lam))
    w_sigma = _softplus(wrho_ref[...])
    e_w = w_mu * alpha
    var_w = alpha * (w_sigma * w_sigma + (1.0 - alpha) * (w_mu * w_mu))

    # MXU matmuls: contract last dim of x with last dim of the (out, in)
    # weight tile -> no on-chip transpose.
    dims = (((1,), (1,)), ((), ()))
    e_acc[...] += jax.lax.dot_general(x, e_w, dims,
                                      preferred_element_type=jnp.float32)
    v_acc[...] += jax.lax.dot_general(x * x, var_w, dims,
                                      preferred_element_type=jnp.float32)

    @pl.when(k == pl.num_programs(2) - 1)
    def _():
        b_sigma = _softplus(brho_ref[...])              # (1, tn)
        var_b = v_acc[...] + b_sigma * b_sigma
        act_ref[...] = (e_acc[...] + bmu_ref[...]
                        + jnp.sqrt(var_b) * eps_ref[...]).astype(act_ref.dtype)


# ----------------------------------------------------------------------------
# KL kernel: parameter-only reduction, grid (out tiles, K tiles), scalar
# accumulated in a resident (1,1) output block.
# ----------------------------------------------------------------------------
def _make_kl_kernel(out_f, in_f, tn, tk, prior_p):
    log_p = math.log(prior_p)
    log_1mp = math.log(1.0 - prior_p)

    def kl_kernel(wmu_ref, wrho_ref, lam_ref, bmu_ref, brho_ref, kl_ref):
        j = pl.program_id(0)
        k = pl.program_id(1)

        @pl.when((j == 0) & (k == 0))
        def _():
            kl_ref[...] = jnp.zeros_like(kl_ref)

        w_mu = wmu_ref[...]
        lam = lam_ref[...]

        w_sigma = _softplus(wrho_ref[...])
        sp_neg = _softplus(-lam)            # = -log(sigmoid(lam)), stable
        alpha = jnp.exp(-sp_neg)            # sigmoid(lam)
        log_alpha = -sp_neg
        log_1malpha = -lam - sp_neg         # log(1 - alpha), stable

        kl_elem = (alpha * (-jnp.log(w_sigma) - 0.5 + (log_alpha - log_p)
                            + 0.5 * (w_sigma * w_sigma + w_mu * w_mu))
                   + (1.0 - alpha) * (log_1malpha - log_1mp))

        # Mask out padded rows/cols so padding never contributes to the KL.
        row = jax.lax.broadcasted_iota(jnp.int32, kl_elem.shape, 0) + j * tn
        col = jax.lax.broadcasted_iota(jnp.int32, kl_elem.shape, 1) + k * tk
        mask = (row < out_f) & (col < in_f)
        kl_ref[...] = kl_ref[...] + jnp.sum(jnp.where(mask, kl_elem, 0.0))

        # Bias KL: add each out-feature block exactly once (at k == 0).
        @pl.when(k == 0)
        def _():
            b_mu = bmu_ref[...]
            b_sigma = _softplus(brho_ref[...])
            kl_b = -jnp.log(b_sigma) - 0.5 + 0.5 * (b_sigma * b_sigma + b_mu * b_mu)
            bcol = jax.lax.broadcasted_iota(jnp.int32, kl_b.shape, 1) + j * tn
            kl_ref[...] = kl_ref[...] + jnp.sum(jnp.where(bcol < out_f, kl_b, 0.0))

    return kl_kernel


# ----------------------------------------------------------------------------
# Wrapper
# ----------------------------------------------------------------------------
@jax.jit
def bayesian_linear_forward(x, weight_mu, weight_rho, lambdal, bias_mu,
                            bias_rho, eps):
    B, in_f = x.shape
    out_f, _ = weight_mu.shape
    f32 = jnp.float32

    # Tile sizes: lane-dense (multiples of 128 on the feature dims), MXU
    # friendly, and small enough that double-buffered blocks fit comfortably
    # in v7x's 64 MiB VMEM (3 weight-like operands of tn x tk each).
    tm = min(256, _round_up(B, 8))
    tn = min(256, _round_up(out_f, 128))
    tk = min(512, _round_up(in_f, 128))
    B_p = _round_up(B, tm)
    OUT_p = _round_up(out_f, tn)
    IN_p = _round_up(in_f, tk)

    x_p = jnp.pad(x.astype(f32), ((0, B_p - B), (0, IN_p - in_f)))
    wmu_p = jnp.pad(weight_mu.astype(f32), ((0, OUT_p - out_f), (0, IN_p - in_f)))
    wrho_p = jnp.pad(weight_rho.astype(f32), ((0, OUT_p - out_f), (0, IN_p - in_f)))
    lam_p = jnp.pad(lambdal.astype(f32), ((0, OUT_p - out_f), (0, IN_p - in_f)))
    bmu_p = jnp.pad(bias_mu.astype(f32), (0, OUT_p - out_f)).reshape(1, OUT_p)
    brho_p = jnp.pad(bias_rho.astype(f32), (0, OUT_p - out_f)).reshape(1, OUT_p)
    eps_p = jnp.pad(eps.astype(f32), ((0, B_p - B), (0, OUT_p - out_f)))

    grid = (B_p // tm, OUT_p // tn, IN_p // tk)

    act_p = pl.pallas_call(
        _act_kernel,
        out_shape=jax.ShapeDtypeStruct((B_p, OUT_p), f32),
        grid_spec=pltpu.PrefetchScalarGridSpec(
            num_scalar_prefetch=0,
            grid=grid,
            in_specs=[
                pl.BlockSpec((tm, tk), lambda i, j, k: (i, k)),   # x
                pl.BlockSpec((tn, tk), lambda i, j, k: (j, k)),   # weight_mu
                pl.BlockSpec((tn, tk), lambda i, j, k: (j, k)),   # weight_rho
                pl.BlockSpec((tn, tk), lambda i, j, k: (j, k)),   # lambdal
                pl.BlockSpec((1, tn), lambda i, j, k: (0, j)),    # bias_mu
                pl.BlockSpec((1, tn), lambda i, j, k: (0, j)),    # bias_rho
                pl.BlockSpec((tm, tn), lambda i, j, k: (i, j)),   # eps
            ],
            out_specs=pl.BlockSpec((tm, tn), lambda i, j, k: (i, j)),
            scratch_shapes=[pltpu.VMEM((tm, tn), f32),
                            pltpu.VMEM((tm, tn), f32)],
        ),
        compiler_params=pltpu.CompilerParams(
            dimension_semantics=("parallel", "parallel", "arbitrary"),
            vmem_limit_bytes=32 * 1024 * 1024,
        ),
    )(x_p, wmu_p, wrho_p, lam_p, bmu_p, brho_p, eps_p)

    kl = pl.pallas_call(
        _make_kl_kernel(out_f, in_f, tn, tk, PRIOR_INCLUSION_PROB),
        out_shape=jax.ShapeDtypeStruct((1, 1), f32),
        grid_spec=pltpu.PrefetchScalarGridSpec(
            num_scalar_prefetch=0,
            grid=(OUT_p // tn, IN_p // tk),
            in_specs=[
                pl.BlockSpec((tn, tk), lambda j, k: (j, k)),      # weight_mu
                pl.BlockSpec((tn, tk), lambda j, k: (j, k)),      # weight_rho
                pl.BlockSpec((tn, tk), lambda j, k: (j, k)),      # lambdal
                pl.BlockSpec((1, tn), lambda j, k: (0, j)),       # bias_mu
                pl.BlockSpec((1, tn), lambda j, k: (0, j)),       # bias_rho
            ],
            out_specs=pl.BlockSpec((1, 1), lambda j, k: (0, 0)),
        ),
        compiler_params=pltpu.CompilerParams(
            dimension_semantics=("arbitrary", "arbitrary"),
            vmem_limit_bytes=32 * 1024 * 1024,
        ),
    )(wmu_p, wrho_p, lam_p, bmu_p, brho_p)

    return act_p[:B, :out_f], kl[0, 0]


# ----------------------------------------------------------------------------
# Pure-JAX reference (matches the PyTorch module's training-path math)
# ----------------------------------------------------------------------------
def reference_forward(x, weight_mu, weight_rho, lambdal, bias_mu, bias_rho, eps):
    alpha_q = jax.nn.sigmoid(lambdal)
    w_sigma = jnp.log1p(jnp.exp(weight_rho))
    b_sigma = jnp.log1p(jnp.exp(bias_rho))
    e_w = weight_mu * alpha_q
    var_w = alpha_q * (w_sigma ** 2 + (1 - alpha_q) * weight_mu ** 2)
    e_b = x @ e_w.T + bias_mu
    var_b = (x ** 2) @ var_w.T + b_sigma ** 2
    act = e_b + jnp.sqrt(var_b) * eps
    kl_bias = jnp.sum(-jnp.log(b_sigma) - 0.5 + (b_sigma ** 2 + bias_mu ** 2) / 2)
    kl_weight = jnp.sum(
        alpha_q * (-jnp.log(w_sigma) - 0.5 + jnp.log(alpha_q / PRIOR_INCLUSION_PROB)
                   + (w_sigma ** 2 + weight_mu ** 2) / 2)
        + (1 - alpha_q) * jnp.log((1 - alpha_q) / (1 - PRIOR_INCLUSION_PROB))
    )
    return act, kl_bias + kl_weight


if __name__ == "__main__":
    key = jax.random.PRNGKey(0)
    k_x, k_wmu, k_wrho, k_lam, k_bmu, k_brho, k_eps = jax.random.split(key, 7)

    batch, in_features, out_features = 8, 32, 16

    x = jax.random.normal(k_x, (batch, in_features), dtype=jnp.float32)
    weight_mu = jax.random.uniform(k_wmu, (out_features, in_features),
                                   minval=-0.2, maxval=0.2, dtype=jnp.float32)
    weight_rho = -9.0 + 0.1 * jax.random.normal(k_wrho, (out_features, in_features),
                                                dtype=jnp.float32)
    lambdal = jax.random.uniform(k_lam, (out_features, in_features),
                                 minval=-15.0, maxval=10.0, dtype=jnp.float32)
    bias_mu = jax.random.uniform(k_bmu, (out_features,),
                                 minval=-0.2, maxval=0.2, dtype=jnp.float32)
    bias_rho = -9.0 + 1.0 * jax.random.normal(k_brho, (out_features,), dtype=jnp.float32)
    eps = jax.random.normal(k_eps, (batch, out_features), dtype=jnp.float32)

    act, kl = bayesian_linear_forward(x, weight_mu, weight_rho, lambdal,
                                      bias_mu, bias_rho, eps)
    jax.block_until_ready((act, kl))

    act_ref, kl_ref = reference_forward(x, weight_mu, weight_rho, lambdal,
                                        bias_mu, bias_rho, eps)
    assert jnp.allclose(act, act_ref, atol=1e-4, rtol=1e-4), "activation mismatch"
    assert jnp.allclose(kl, kl_ref, atol=1e-2, rtol=1e-3), "KL mismatch"

    print("KERNEL_OK")
</pallas_src>

<mosaic_0001>
module attributes {stable_mosaic.version = 11 : i64} {
  func.func @_act_kernel(%arg0: i32, %arg1: i32, %arg2: i32, %arg3: memref<8x128xf32, #tpu.memory_space<vmem>>, %arg4: memref<128x128xf32, #tpu.memory_space<vmem>>, %arg5: memref<128x128xf32, #tpu.memory_space<vmem>>, %arg6: memref<128x128xf32, #tpu.memory_space<vmem>>, %arg7: memref<1x128xf32, #tpu.memory_space<vmem>>, %arg8: memref<1x128xf32, #tpu.memory_space<vmem>>, %arg9: memref<8x128xf32, #tpu.memory_space<vmem>>, %arg10: memref<8x128xf32, #tpu.memory_space<vmem>>, %arg11: memref<8x128xf32, #tpu.memory_space<vmem>>, %arg12: memref<8x128xf32, #tpu.memory_space<vmem>>) attributes {dimension_semantics = [#tpu.dimension_semantics<parallel>, #tpu.dimension_semantics<parallel>, #tpu.dimension_semantics<arbitrary>], iteration_bounds = array<i64: 1, 1, 1>, scalar_prefetch = 0 : i64, scratch_operands = 2 : i64, tpu.core_type = #tpu.core_type<tc>, window_params = [{transform_indices = @transform_0, window_bounds = array<i64: 8, 128>}, {transform_indices = @transform_1, window_bounds = array<i64: 128, 128>}, {transform_indices = @transform_2, window_bounds = array<i64: 128, 128>}, {transform_indices = @transform_3, window_bounds = array<i64: 128, 128>}, {transform_indices = @transform_4, window_bounds = array<i64: 1, 128>}, {transform_indices = @transform_5, window_bounds = array<i64: 1, 128>}, {transform_indices = @transform_6, window_bounds = array<i64: 8, 128>}, {transform_indices = @transform_7, window_bounds = array<i64: 8, 128>}]} {
    %c0_i32 = arith.constant 0 : i32
    %0 = arith.cmpi eq, %arg2, %c0_i32 : i32
    %1 = arith.extui %0 : i1 to i32
    %c0_i32_0 = arith.constant 0 : i32
    %2 = arith.cmpi ne, %1, %c0_i32_0 : i32
    scf.if %2 {
      %cst_25 = arith.constant 0.000000e+00 : f32
      %41 = vector.broadcast %cst_25 : f32 to vector<8x128xf32>
      %c0_26 = arith.constant 0 : index
      %c0_27 = arith.constant 0 : index
      %42 = vector.load %arg11[%c0_26, %c0_27] : memref<8x128xf32, #tpu.memory_space<vmem>>, vector<8x128xf32>
      tpu.vector_store %arg11[%c0_26, %c0_27], %41 {strides = array<i32>} : memref<8x128xf32, #tpu.memory_space<vmem>>, vector<8x128xf32>,
      %cst_28 = arith.constant 0.000000e+00 : f32
      %43 = vector.broadcast %cst_28 : f32 to vector<8x128xf32>
      %c0_29 = arith.constant 0 : index
      %c0_30 = arith.constant 0 : index
      %44 = vector.load %arg12[%c0_29, %c0_30] : memref<8x128xf32, #tpu.memory_space<vmem>>, vector<8x128xf32>
      tpu.vector_store %arg12[%c0_29, %c0_30], %43 {strides = array<i32>} : memref<8x128xf32, #tpu.memory_space<vmem>>, vector<8x128xf32>,
    } else {
    }
    %c0 = arith.constant 0 : index
    %c0_1 = arith.constant 0 : index
    %3 = vector.load %arg3[%c0, %c0_1] : memref<8x128xf32, #tpu.memory_space<vmem>>, vector<8x128xf32>
    %c0_2 = arith.constant 0 : index
    %c0_3 = arith.constant 0 : index
    %4 = vector.load %arg4[%c0_2, %c0_3] : memref<128x128xf32, #tpu.memory_space<vmem>>, vector<128x128xf32>
    %c0_4 = arith.constant 0 : index
    %c0_5 = arith.constant 0 : index
    %5 = vector.load %arg6[%c0_4, %c0_5] : memref<128x128xf32, #tpu.memory_space<vmem>>, vector<128x128xf32>
    %cst = arith.constant 0.000000e+00 : f32
    %6 = vector.broadcast %cst : f32 to vector<128x128xf32>
    %7 = arith.subf %6, %5 : vector<128x128xf32>
    %8 = math.exp %7 : vector<128x128xf32>
    %cst_6 = arith.constant 1.000000e+00 : f32
    %9 = vector.broadcast %cst_6 : f32 to vector<128x128xf32>
    %10 = arith.addf %9, %8 : vector<128x128xf32>
    %cst_7 = arith.constant 1.000000e+00 : f32
    %11 = vector.broadcast %cst_7 : f32 to vector<128x128xf32>
    %12 = arith.divf %11, %10 : vector<128x128xf32>
    %c0_8 = arith.constant 0 : index
    %c0_9 = arith.constant 0 : index
    %13 = vector.load %arg5[%c0_8, %c0_9] : memref<128x128xf32, #tpu.memory_space<vmem>>, vector<128x128xf32>
    %cst_10 = arith.constant 2.000000e+01 : f32
    %14 = vector.broadcast %cst_10 : f32 to vector<128x128xf32>
    %15 = arith.cmpf ogt, %13, %14 : vector<128x128xf32>
    %cst_11 = arith.constant 2.000000e+01 : f32
    %16 = vector.broadcast %cst_11 : f32 to vector<128x128xf32>
    %17 = arith.minimumf %13, %16 : vector<128x128xf32>
    %18 = math.exp %17 : vector<128x128xf32>
    %19 = math.log1p %18 : vector<128x128xf32>
    %20 = arith.select %15, %13, %19 : vector<128x128xi1>, vector<128x128xf32>
    %21 = arith.mulf %4, %12 : vector<128x128xf32>
    %22 = arith.mulf %20, %20 : vector<128x128xf32>
    %cst_12 = arith.constant 1.000000e+00 : f32
    %23 = vector.broadcast %cst_12 : f32 to vector<128x128xf32>
    %24 = arith.subf %23, %12 : vector<128x128xf32>
    %25 = arith.mulf %4, %4 : vector<128x128xf32>
    %26 = arith.mulf %24, %25 : vector<128x128xf32>
    %27 = arith.addf %22, %26 : vector<128x128xf32>
    %28 = arith.mulf %12, %27 : vector<128x128xf32>
    %c0_13 = arith.constant 0 : index
    %c0_14 = arith.constant 0 : index
    %29 = vector.load %arg11[%c0_13, %c0_14] : memref<8x128xf32, #tpu.memory_space<vmem>>, vector<8x128xf32>
    %cst_15 = arith.constant dense<0.000000e+00> : vector<8x128xf32>
    %30 = tpu.matmul %3, %21, %cst_15 {dimension_numbers = #tpu.dot_dimension_numbers<[1], [1], [0], [0], [0, 0, 1, 0], [], []>} : vector<8x128xf32>, vector<128x128xf32>, vector<8x128xf32> -> vector<8x128xf32>
    %31 = arith.addf %29, %30 : vector<8x128xf32>
    %c0_16 = arith.constant 0 : index
    %c0_17 = arith.constant 0 : index
    %32 = vector.load %arg11[%c0_16, %c0_17] : memref<8x128xf32, #tpu.memory_space<vmem>>, vector<8x128xf32>
    tpu.vector_store %arg11[%c0_16, %c0_17], %31 {strides = array<i32>} : memref<8x128xf32, #tpu.memory_space<vmem>>, vector<8x128xf32>,
    %c0_18 = arith.constant 0 : index
    %c0_19 = arith.constant 0 : index
    %33 = vector.load %arg12[%c0_18, %c0_19] : memref<8x128xf32, #tpu.memory_space<vmem>>, vector<8x128xf32>
    %34 = arith.mulf %3, %3 : vector<8x128xf32>
    %cst_20 = arith.constant dense<0.000000e+00> : vector<8x128xf32>
    %35 = tpu.matmul %34, %28, %cst_20 {dimension_numbers = #tpu.dot_dimension_numbers<[1], [1], [0], [0], [0, 0, 1, 0], [], []>} : vector<8x128xf32>, vector<128x128xf32>, vector<8x128xf32> -> vector<8x128xf32>
    %36 = arith.addf %33, %35 : vector<8x128xf32>
    %c0_21 = arith.constant 0 : index
    %c0_22 = arith.constant 0 : index
    %37 = vector.load %arg12[%c0_21, %c0_22] : memref<8x128xf32, #tpu.memory_space<vmem>>, vector<8x128xf32>
    tpu.vector_store %arg12[%c0_21, %c0_22], %36 {strides = array<i32>} : memref<8x128xf32, #tpu.memory_space<vmem>>, vector<8x128xf32>,
    %c0_i32_23 = arith.constant 0 : i32
    %38 = arith.cmpi eq, %arg2, %c0_i32_23 : i32
    %39 = arith.extui %38 : i1 to i32
    %c0_i32_24 = arith.constant 0 : i32
    %40 = arith.cmpi ne, %39, %c0_i32_24 : i32
    scf.if %40 {
      %c0_25 = arith.constant 0 : index
      %c0_26 = arith.constant 0 : index
      %41 = vector.load %arg8[%c0_25, %c0_26] : memref<1x128xf32, #tpu.memory_space<vmem>>, vector<1x128xf32>
      %cst_27 = arith.constant 2.000000e+01 : f32
      %42 = vector.broadcast %cst_27 : f32 to vector<1x128xf32>
      %43 = arith.cmpf ogt, %41, %42 : vector<1x128xf32>
      %cst_28 = arith.constant 2.000000e+01 : f32
      %44 = vector.broadcast %cst_28 : f32 to vector<1x128xf32>
      %45 = arith.minimumf %41, %44 : vector<1x128xf32>
      %46 = math.exp %45 : vector<1x128xf32>
      %47 = math.log1p %46 : vector<1x128xf32>
      %48 = arith.select %43, %41, %47 : vector<1x128xi1>, vector<1x128xf32>
      %c0_29 = arith.constant 0 : index
      %c0_30 = arith.constant 0 : index
      %49 = vector.load %arg12[%c0_29, %c0_30] : memref<8x128xf32, #tpu.memory_space<vmem>>, vector<8x128xf32>
      %50 = arith.mulf %48, %48 : vector<1x128xf32>
      %51 = vector.broadcast %50 : vector<1x128xf32> to vector<8x128xf32>
      %52 = arith.addf %49, %51 : vector<8x128xf32>
      %c0_31 = arith.constant 0 : index
      %c0_32 = arith.constant 0 : index
      %53 = vector.load %arg11[%c0_31, %c0_32] : memref<8x128xf32, #tpu.memory_space<vmem>>, vector<8x128xf32>
      %c0_33 = arith.constant 0 : index
      %c0_34 = arith.constant 0 : index
      %54 = vector.load %arg7[%c0_33, %c0_34] : memref<1x128xf32, #tpu.memory_space<vmem>>, vector<1x128xf32>
      %55 = vector.broadcast %54 : vector<1x128xf32> to vector<8x128xf32>
      %56 = arith.addf %53, %55 : vector<8x128xf32>
      %57 = math.sqrt %52 : vector<8x128xf32>
      %c0_35 = arith.constant 0 : index
      %c0_36 = arith.constant 0 : index
      %58 = vector.load %arg9[%c0_35, %c0_36] : memref<8x128xf32, #tpu.memory_space<vmem>>, vector<8x128xf32>
      %59 = arith.mulf %57, %58 : vector<8x128xf32>
      %60 = arith.addf %56, %59 : vector<8x128xf32>
      %c0_37 = arith.constant 0 : index
      %c0_38 = arith.constant 0 : index
      %61 = vector.load %arg10[%c0_37, %c0_38] : memref<8x128xf32, #tpu.memory_space<vmem>>, vector<8x128xf32>
      tpu.vector_store %arg10[%c0_37, %c0_38], %60 {strides = array<i32>} : memref<8x128xf32, #tpu.memory_space<vmem>>, vector<8x128xf32>,
    } else {
    }
    return
  }
  func.func @transform_0(%arg0: i32, %arg1: i32, %arg2: i32) -> (i32, i32) {
    %c0_i32 = arith.constant 0 : i32
    return %arg0, %arg2 : i32, i32
  }
  func.func @transform_1(%arg0: i32, %arg1: i32, %arg2: i32) -> (i32, i32) {
    %c0_i32 = arith.constant 0 : i32
    return %arg1, %arg2 : i32, i32
  }
  func.func @transform_2(%arg0: i32, %arg1: i32, %arg2: i32) -> (i32, i32) {
    %c0_i32 = arith.constant 0 : i32
    return %arg1, %arg2 : i32, i32
  }
  func.func @transform_3(%arg0: i32, %arg1: i32, %arg2: i32) -> (i32, i32) {
    %c0_i32 = arith.constant 0 : i32
    return %arg1, %arg2 : i32, i32
  }
  func.func @transform_4(%arg0: i32, %arg1: i32, %arg2: i32) -> (i32, i32) {
    %c0_i32 = arith.constant 0 : i32
    %c0_i32_0 = arith.constant 0 : i32
    return %c0_i32, %arg1 : i32, i32
  }
  func.func @transform_5(%arg0: i32, %arg1: i32, %arg2: i32) -> (i32, i32) {
    %c0_i32 = arith.constant 0 : i32
    %c0_i32_0 = arith.constant 0 : i32
    return %c0_i32, %arg1 : i32, i32
  }
  func.func @transform_6(%arg0: i32, %arg1: i32, %arg2: i32) -> (i32, i32) {
    %c0_i32 = arith.constant 0 : i32
    return %arg0, %arg1 : i32, i32
  }
  func.func @transform_7(%arg0: i32, %arg1: i32, %arg2: i32) -> (i32, i32) {
    %c0_i32 = arith.constant 0 : i32
    return %arg0, %arg1 : i32, i32
  }
}

module attributes {stable_mosaic.version = 11 : i64} {
  func.func @kl_kernel(%arg0: i32, %arg1: i32, %arg2: memref<128x128xf32, #tpu.memory_space<vmem>>, %arg3: memref<128x128xf32, #tpu.memory_space<vmem>>, %arg4: memref<128x128xf32, #tpu.memory_space<vmem>>, %arg5: memref<1x128xf32, #tpu.memory_space<vmem>>, %arg6: memref<1x128xf32, #tpu.memory_space<vmem>>, %arg7: memref<1x1xf32, #tpu.memory_space<vmem>>) attributes {dimension_semantics = [#tpu.dimension_semantics<arbitrary>, #tpu.dimension_semantics<arbitrary>], iteration_bounds = array<i64: 1, 1>, scalar_prefetch = 0 : i64, scratch_operands = 0 : i64, tpu.core_type = #tpu.core_type<tc>, window_params = [{transform_indices = @transform_0, window_bounds = array<i64: 128, 128>}, {transform_indices = @transform_1, window_bounds = array<i64: 128, 128>}, {transform_indices = @transform_2, window_bounds = array<i64: 128, 128>}, {transform_indices = @transform_3, window_bounds = array<i64: 1, 128>}, {transform_indices = @transform_4, window_bounds = array<i64: 1, 128>}, {pipeline_mode = #tpu.pipeline_mode<synchronous>, transform_indices = @transform_5, window_bounds = array<i64: 1, 1>}]} {
    %c0_i32 = arith.constant 0 : i32
    %0 = arith.cmpi eq, %arg0, %c0_i32 : i32
    %c0_i32_0 = arith.constant 0 : i32
    %1 = arith.cmpi eq, %arg1, %c0_i32_0 : i32
    %2 = arith.andi %0, %1 : i1
    %3 = arith.extui %2 : i1 to i32
    %c0_i32_1 = arith.constant 0 : i32
    %4 = arith.cmpi ne, %3, %c0_i32_1 : i32
    scf.if %4 {
      %cst_29 = arith.constant 0.000000e+00 : f32
      %79 = vector.broadcast %cst_29 : f32 to vector<1x1xf32>
      %c0_30 = arith.constant 0 : index
      %c0_31 = arith.constant 0 : index
      %80 = vector.load %arg7[%c0_30, %c0_31] : memref<1x1xf32, #tpu.memory_space<vmem>>, vector<1x1xf32>
      tpu.vector_store %arg7[%c0_30, %c0_31], %79 {strides = array<i32>} : memref<1x1xf32, #tpu.memory_space<vmem>>, vector<1x1xf32>,
    } else {
    }
    %c0 = arith.constant 0 : index
    %c0_2 = arith.constant 0 : index
    %5 = vector.load %arg2[%c0, %c0_2] : memref<128x128xf32, #tpu.memory_space<vmem>>, vector<128x128xf32>
    %c0_3 = arith.constant 0 : index
    %c0_4 = arith.constant 0 : index
    %6 = vector.load %arg4[%c0_3, %c0_4] : memref<128x128xf32, #tpu.memory_space<vmem>>, vector<128x128xf32>
    %c0_5 = arith.constant 0 : index
    %c0_6 = arith.constant 0 : index
    %7 = vector.load %arg3[%c0_5, %c0_6] : memref<128x128xf32, #tpu.memory_space<vmem>>, vector<128x128xf32>
    %cst = arith.constant 2.000000e+01 : f32
    %8 = vector.broadcast %cst : f32 to vector<128x128xf32>
    %9 = arith.cmpf ogt, %7, %8 : vector<128x128xf32>
    %cst_7 = arith.constant 2.000000e+01 : f32
    %10 = vector.broadcast %cst_7 : f32 to vector<128x128xf32>
    %11 = arith.minimumf %7, %10 : vector<128x128xf32>
    %12 = math.exp %11 : vector<128x128xf32>
    %13 = math.log1p %12 : vector<128x128xf32>
    %14 = arith.select %9, %7, %13 : vector<128x128xi1>, vector<128x128xf32>
    %cst_8 = arith.constant 0.000000e+00 : f32
    %15 = vector.broadcast %cst_8 : f32 to vector<128x128xf32>
    %16 = arith.subf %15, %6 : vector<128x128xf32>
    %cst_9 = arith.constant 2.000000e+01 : f32
    %17 = vector.broadcast %cst_9 : f32 to vector<128x128xf32>
    %18 = arith.cmpf ogt, %16, %17 : vector<128x128xf32>
    %cst_10 = arith.constant 2.000000e+01 : f32
    %19 = vector.broadcast %cst_10 : f32 to vector<128x128xf32>
    %20 = arith.minimumf %16, %19 : vector<128x128xf32>
    %21 = math.exp %20 : vector<128x128xf32>
    %22 = math.log1p %21 : vector<128x128xf32>
    %23 = arith.select %18, %16, %22 : vector<128x128xi1>, vector<128x128xf32>
    %cst_11 = arith.constant 0.000000e+00 : f32
    %24 = vector.broadcast %cst_11 : f32 to vector<128x128xf32>
    %25 = arith.subf %24, %23 : vector<128x128xf32>
    %26 = math.exp %25 : vector<128x128xf32>
    %cst_12 = arith.constant 0.000000e+00 : f32
    %27 = vector.broadcast %cst_12 : f32 to vector<128x128xf32>
    %28 = arith.subf %27, %23 : vector<128x128xf32>
    %cst_13 = arith.constant 0.000000e+00 : f32
    %29 = vector.broadcast %cst_13 : f32 to vector<128x128xf32>
    %30 = arith.subf %29, %6 : vector<128x128xf32>
    %31 = arith.subf %30, %23 : vector<128x128xf32>
    %32 = math.log %14 : vector<128x128xf32>
    %cst_14 = arith.constant 0.000000e+00 : f32
    %33 = vector.broadcast %cst_14 : f32 to vector<128x128xf32>
    %34 = arith.subf %33, %32 : vector<128x128xf32>
    %cst_15 = arith.constant 5.000000e-01 : f32
    %35 = vector.broadcast %cst_15 : f32 to vector<128x128xf32>
    %36 = arith.subf %34, %35 : vector<128x128xf32>
    %cst_16 = arith.constant -2.30258512 : f32
    %37 = vector.broadcast %cst_16 : f32 to vector<128x128xf32>
    %38 = arith.subf %28, %37 : vector<128x128xf32>
    %39 = arith.addf %36, %38 : vector<128x128xf32>
    %40 = arith.mulf %14, %14 : vector<128x128xf32>
    %41 = arith.mulf %5, %5 : vector<128x128xf32>
    %42 = arith.addf %40, %41 : vector<128x128xf32>
    %cst_17 = arith.constant 5.000000e-01 : f32
    %43 = vector.broadcast %cst_17 : f32 to vector<128x128xf32>
    %44 = arith.mulf %43, %42 : vector<128x128xf32>
    %45 = arith.addf %39, %44 : vector<128x128xf32>
    %46 = arith.mulf %26, %45 : vector<128x128xf32>
    %cst_18 = arith.constant 1.000000e+00 : f32
    %47 = vector.broadcast %cst_18 : f32 to vector<128x128xf32>
    %48 = arith.subf %47, %26 : vector<128x128xf32>
    %cst_19 = arith.constant -0.105360515 : f32
    %49 = vector.broadcast %cst_19 : f32 to vector<128x128xf32>
    %50 = arith.subf %31, %49 : vector<128x128xf32>
    %51 = arith.mulf %48, %50 : vector<128x128xf32>
    %52 = arith.addf %46, %51 : vector<128x128xf32>
    %53 = tpu.iota {dimensions = array<i32: 0>} : vector<128x128xi32>
    %c128_i32 = arith.constant 128 : i32
    %54 = arith.muli %arg0, %c128_i32 : i32
    %55 = vector.broadcast %54 : i32 to vector<128x128xi32>
    %56 = arith.addi %53, %55 : vector<128x128xi32>
    %57 = tpu.iota {dimensions = array<i32: 1>} : vector<128x128xi32>
    %c128_i32_20 = arith.constant 128 : i32
    %58 = arith.muli %arg1, %c128_i32_20 : i32
    %59 = vector.broadcast %58 : i32 to vector<128x128xi32>
    %60 = arith.addi %57, %59 : vector<128x128xi32>
    %c16_i32 = arith.constant 16 : i32
    %61 = vector.broadcast %c16_i32 : i32 to vector<128x128xi32>
    %62 = arith.cmpi slt, %56, %61 : vector<128x128xi32>
    %c32_i32 = arith.constant 32 : i32
    %63 = vector.broadcast %c32_i32 : i32 to vector<128x128xi32>
    %64 = arith.cmpi slt, %60, %63 : vector<128x128xi32>
    %65 = arith.andi %62, %64 : vector<128x128xi1>
    %c0_21 = arith.constant 0 : index
    %c0_22 = arith.constant 0 : index
    %66 = vector.load %arg7[%c0_21, %c0_22] : memref<1x1xf32, #tpu.memory_space<vmem>>, vector<1x1xf32>
    %cst_23 = arith.constant 0.000000e+00 : f32
    %67 = vector.broadcast %cst_23 : f32 to vector<128x128xf32>
    %68 = arith.select %65, %52, %67 : vector<128x128xi1>, vector<128x128xf32>
    %69 = vector.shape_cast %68 : vector<128x128xf32> to vector<1x128x128xf32>
    %cst_24 = arith.constant dense<0.000000e+00> : vector<1xf32>
    %70 = vector.multi_reduction <add>, %69, %cst_24 [1, 2] : vector<1x128x128xf32> to vector<1xf32>
    %71 = vector.shape_cast %70 : vector<1xf32> to vector<1x1x1xf32>
    %72 = vector.extract %71[0, 0, 0] : f32 from vector<1x1x1xf32>
    %73 = vector.broadcast %72 : f32 to vector<1x1xf32>
    %74 = arith.addf %66, %73 : vector<1x1xf32>
    %c0_25 = arith.constant 0 : index
    %c0_26 = arith.constant 0 : index
    %75 = vector.load %arg7[%c0_25, %c0_26] : memref<1x1xf32, #tpu.memory_space<vmem>>, vector<1x1xf32>
    tpu.vector_store %arg7[%c0_25, %c0_26], %74 {strides = array<i32>} : memref<1x1xf32, #tpu.memory_space<vmem>>, vector<1x1xf32>,
    %c0_i32_27 = arith.constant 0 : i32
    %76 = arith.cmpi eq, %arg1, %c0_i32_27 : i32
    %77 = arith.extui %76 : i1 to i32
    %c0_i32_28 = arith.constant 0 : i32
    %78 = arith.cmpi ne, %77, %c0_i32_28 : i32
    scf.if %78 {
      %c0_29 = arith.constant 0 : index
      %c0_30 = arith.constant 0 : index
      %79 = vector.load %arg5[%c0_29, %c0_30] : memref<1x128xf32, #tpu.memory_space<vmem>>, vector<1x128xf32>
      %c0_31 = arith.constant 0 : index
      %c0_32 = arith.constant 0 : index
      %80 = vector.load %arg6[%c0_31, %c0_32] : memref<1x128xf32, #tpu.memory_space<vmem>>, vector<1x128xf32>
      %cst_33 = arith.constant 2.000000e+01 : f32
      %81 = vector.broadcast %cst_33 : f32 to vector<1x128xf32>
      %82 = arith.cmpf ogt, %80, %81 : vector<1x128xf32>
      %cst_34 = arith.constant 2.000000e+01 : f32
      %83 = vector.broadcast %cst_34 : f32 to vector<1x128xf32>
      %84 = arith.minimumf %80, %83 : vector<1x128xf32>
      %85 = math.exp %84 : vector<1x128xf32>
      %86 = math.log1p %85 : vector<1x128xf32>
      %87 = arith.select %82, %80, %86 : vector<1x128xi1>, vector<1x128xf32>
      %88 = math.log %87 : vector<1x128xf32>
      %cst_35 = arith.constant 0.000000e+00 : f32
      %89 = vector.broadcast %cst_35 : f32 to vector<1x128xf32>
      %90 = arith.subf %89, %88 : vector<1x128xf32>
      %cst_36 = arith.constant 5.000000e-01 : f32
      %91 = vector.broadcast %cst_36 : f32 to vector<1x128xf32>
      %92 = arith.subf %90, %91 : vector<1x128xf32>
      %93 = arith.mulf %87, %87 : vector<1x128xf32>
      %94 = arith.mulf %79, %79 : vector<1x128xf32>
      %95 = arith.addf %93, %94 : vector<1x128xf32>
      %cst_37 = arith.constant 5.000000e-01 : f32
      %96 = vector.broadcast %cst_37 : f32 to vector<1x128xf32>
      %97 = arith.mulf %96, %95 : vector<1x128xf32>
      %98 = arith.addf %92, %97 : vector<1x128xf32>
      %99 = tpu.iota {dimensions = array<i32: 1>} : vector<1x128xi32>
      %c128_i32_38 = arith.constant 128 : i32
      %100 = arith.muli %arg0, %c128_i32_38 : i32
      %101 = vector.broadcast %100 : i32 to vector<1x128xi32>
      %102 = arith.addi %99, %101 : vector<1x128xi32>
      %c0_39 = arith.constant 0 : index
      %c0_40 = arith.constant 0 : index
      %103 = vector.load %arg7[%c0_39, %c0_40] : memref<1x1xf32, #tpu.memory_space<vmem>>, vector<1x1xf32>
      %c16_i32_41 = arith.constant 16 : i32
      %104 = vector.broadcast %c16_i32_41 : i32 to vector<1x128xi32>
      %105 = arith.cmpi slt, %102, %104 : vector<1x128xi32>
      %cst_42 = arith.constant 0.000000e+00 : f32
      %106 = vector.broadcast %cst_42 : f32 to vector<1x128xf32>
      %107 = arith.select %105, %98, %106 : vector<1x128xi1>, vector<1x128xf32>
      %108 = vector.shape_cast %107 : vector<1x128xf32> to vector<1x1x128xf32>
      %cst_43 = arith.constant dense<0.000000e+00> : vector<1xf32>
      %109 = vector.multi_reduction <add>, %108, %cst_43 [1, 2] : vector<1x1x128xf32> to vector<1xf32>
      %110 = vector.shape_cast %109 : vector<1xf32> to vector<1x1x1xf32>
      %111 = vector.extract %110[0, 0, 0] : f32 from vector<1x1x1xf32>
      %112 = vector.broadcast %111 : f32 to vector<1x1xf32>
      %113 = arith.addf %103, %112 : vector<1x1xf32>
      %c0_44 = arith.constant 0 : index
      %c0_45 = arith.constant 0 : index
      %114 = vector.load %arg7[%c0_44, %c0_45] : memref<1x1xf32, #tpu.memory_space<vmem>>, vector<1x1xf32>
      tpu.vector_store %arg7[%c0_44, %c0_45], %113 {strides = array<i32>} : memref<1x1xf32, #tpu.memory_space<vmem>>, vector<1x1xf32>,
    } else {
    }
    return
  }
  func.func @transform_0(%arg0: i32, %arg1: i32) -> (i32, i32) {
    %c0_i32 = arith.constant 0 : i32
    return %arg0, %arg1 : i32, i32
  }
  func.func @transform_1(%arg0: i32, %arg1: i32) -> (i32, i32) {
    %c0_i32 = arith.constant 0 : i32
    return %arg0, %arg1 : i32, i32
  }
  func.func @transform_2(%arg0: i32, %arg1: i32) -> (i32, i32) {
    %c0_i32 = arith.constant 0 : i32
    return %arg0, %arg1 : i32, i32
  }
  func.func @transform_3(%arg0: i32, %arg1: i32) -> (i32, i32) {
    %c0_i32 = arith.constant 0 : i32
    %c0_i32_0 = arith.constant 0 : i32
    return %c0_i32, %arg0 : i32, i32
  }
  func.func @transform_4(%arg0: i32, %arg1: i32) -> (i32, i32) {
    %c0_i32 = arith.constant 0 : i32
    %c0_i32_0 = arith.constant 0 : i32
    return %c0_i32, %arg0 : i32, i32
  }
  func.func @transform_5(%arg0: i32, %arg1: i32) -> (i32, i32) {
    %c0_i32 = arith.constant 0 : i32
    %c0_i32_0 = arith.constant 0 : i32
    %c0_i32_1 = arith.constant 0 : i32
    return %c0_i32, %c0_i32_0 : i32, i32
  }
}

</mosaic_0001>

<llo_original>
// kernel: bayesian_linear_forward.2
$region0: #{bayesian_linear_forward.2}
  #allocation0 [shape = 'u32[]', space=smem, size = 0x4, offset = 0x4, fixed_abs, tag = 'smem constant byte address 0x4 - core index']
  #allocation1 [shape = 'u32[144,128]{1,0:T(1,128)}', space=vmem, size = 0x12000, scoped, tag = 'internal scratch']
  #allocation2 [shape = 'f32[8,128]{1,0:T(8,128)}', space=vmem, size = 0x1000, scoped, tag = 'scratch operand']
  #allocation3 [shape = 'f32[8,128]{1,0:T(8,128)}', space=vmem, size = 0x1000, scoped, tag = 'scratch operand']
  %s0 = inlined_call_operand.vmem [shape: f32[8,128], index: 0, kind: input, shape index: {}]
  %s1 = inlined_call_operand.vmem [shape: f32[128,128], index: 1, kind: input, shape index: {}]
  %s2 = inlined_call_operand.vmem [shape: f32[128,128], index: 2, kind: input, shape index: {}]
  %s3 = inlined_call_operand.vmem [shape: f32[128,128], index: 3, kind: input, shape index: {}]
  %s4 = inlined_call_operand.vmem [shape: f32[1,128], index: 4, kind: input, shape index: {}]
  %s5 = inlined_call_operand.vmem [shape: f32[1,128], index: 5, kind: input, shape index: {}]
  %s6 = inlined_call_operand.vmem [shape: f32[8,128], index: 6, kind: input, shape index: {}]
  %s7 = inlined_call_operand.hbm [shape: f32[8,128], index: 7, kind: output, shape index: {}]
  %s8 = sld [smem:[#allocation0]]
  $region46: #{bayesian_linear_forward.2} parent=0
    _
  %s10 = ssub.s32 1, %s8
  %s11 = scalar_select 0, %s10, %s8
  $region1: #{bayesian_linear_forward.2} parent=0
    #allocation4 [shape = 'u8[4096]{0}', space=vmem, size = 0x1000, scoped, tag = 'output window, operand 0, single buffered']
    #allocation5 [shape = 's32[1]{0}', space=sflag, size = 0x4, scoped, tag = 'scoped memory for bayesian_linear_forward.2']
    %12 = vsyncpa [#allocation5], 0
    // Predicated region
    $region2: #{bayesian_linear_forward.2} parent=1 // pred_check
      _
    $region3: #{bayesian_linear_forward.2} parent=1 // pred_check_branch
      %14 = sbr.rel (0) target = $region5
    $region4: #{bayesian_linear_forward.2} parent=1 // pred_region
      _
    $region5: #{bayesian_linear_forward.2} parent=1 // pred_fallthru
      _
    // Predicated region
    $region6: #{bayesian_linear_forward.2} parent=1 // pred_check
      _
    $region7: #{bayesian_linear_forward.2} parent=1 // pred_check_branch
      %16 = sbr.rel (0) target = $region9
    $region8: #{bayesian_linear_forward.2} parent=1 // pred_region
      _
    $region9: #{bayesian_linear_forward.2} parent=1 // pred_fallthru
      _
    // Predicated region
    $region10: #{bayesian_linear_forward.2} parent=1 // pred_check
      _
    $region11: #{bayesian_linear_forward.2} parent=1 // pred_check_branch
      %18 = sbr.rel (0) target = $region13
    $region12: #{bayesian_linear_forward.2} parent=1 // pred_region
      _
    $region13: #{bayesian_linear_forward.2} parent=1 // pred_fallthru
      _
    // Predicated region
    $region14: #{bayesian_linear_forward.2} parent=1 // pred_check
      _
    $region15: #{bayesian_linear_forward.2} parent=1 // pred_check_branch
      %20 = sbr.rel (0) target = $region17
    $region16: #{bayesian_linear_forward.2} parent=1 // pred_region
      _
    $region17: #{bayesian_linear_forward.2} parent=1 // pred_fallthru
      _
    // Predicated region
    $region18: #{bayesian_linear_forward.2} parent=1 // pred_check
      _
    $region19: #{bayesian_linear_forward.2} parent=1 // pred_check_branch
      %22 = sbr.rel (0) target = $region21
    $region20: #{bayesian_linear_forward.2} parent=1 // pred_region
      _
    $region21: #{bayesian_linear_forward.2} parent=1 // pred_fallthru
      _
    // Predicated region
    $region22: #{bayesian_linear_forward.2} parent=1 // pred_check
      _
    $region23: #{bayesian_linear_forward.2} parent=1 // pred_check_branch
      %24 = sbr.rel (0) target = $region25
    $region24: #{bayesian_linear_forward.2} parent=1 // pred_region
      _
    $region25: #{bayesian_linear_forward.2} parent=1 // pred_fallthru
      _
    // Predicated region
    $region26: #{bayesian_linear_forward.2} parent=1 // pred_check
      _
    $region27: #{bayesian_linear_forward.2} parent=1 // pred_check_branch
      %26 = sbr.rel (0) target = $region29
    $region28: #{bayesian_linear_forward.2} parent=1 // pred_region
      _
    $region29: #{bayesian_linear_forward.2} parent=1 // pred_fallthru
      _
    %p27 = scmp.eq.s32.totalorder 0, 0
    // Predicated region
    $region30: #{bayesian_linear_forward.2} parent=1 // pred_check
      %p28 = pneg %p27
    $region31: #{bayesian_linear_forward.2} parent=1 // pred_check_branch
      %30 = sbr.rel (%p28) target = $region33
    $region32: #{bayesian_linear_forward.2} parent=1 // pred_region
      %31 = vst [vmem:[#allocation2] sm:$0xff] 0.0
      %32 = vst [vmem:[#allocation3] sm:$0xff] 0.0
    $region33: #{bayesian_linear_forward.2} parent=1 // pred_fallthru
      _
    %v33 = vld [vmem:[%s0] sm:$0xff]
    %v34 = vld [vmem:[%s1] sm:$0xff]
    %v35 = vld [vmem:[%s1 + $0x8] sm:$0xff]
    %v36 = vld [vmem:[%s1 + $0x10] sm:$0xff]
    %v37 = vld [vmem:[%s1 + $0x18] sm:$0xff]
    %v38 = vld [vmem:[%s1 + $0x20] sm:$0xff]
    %v39 = vld [vmem:[%s1 + $0x28] sm:$0xff]
    %v40 = vld [vmem:[%s1 + $0x30] sm:$0xff]
    %v41 = vld [vmem:[%s1 + $0x38] sm:$0xff]
    %v42 = vld [vmem:[%s1 + $0x40] sm:$0xff]
    %v43 = vld [vmem:[%s1 + $0x48] sm:$0xff]
    %v44 = vld [vmem:[%s1 + $0x50] sm:$0xff]
    %v45 = vld [vmem:[%s1 + $0x58] sm:$0xff]
    %v46 = vld [vmem:[%s1 + $0x60] sm:$0xff]
    %v47 = vld [vmem:[%s1 + $0x68] sm:$0xff]
    %v48 = vld [vmem:[%s1 + $0x70] sm:$0xff]
    %v49 = vld [vmem:[%s1 + $0x78] sm:$0xff]
    %v50 = vld [vmem:[%s3] sm:$0xff]
    %v51 = vld [vmem:[%s3 + $0x8] sm:$0xff]
    %v52 = vld [vmem:[%s3 + $0x10] sm:$0xff]
    %v53 = vld [vmem:[%s3 + $0x18] sm:$0xff]
    %v54 = vld [vmem:[%s3 + $0x20] sm:$0xff]
    %v55 = vld [vmem:[%s3 + $0x28] sm:$0xff]
    %v56 = vld [vmem:[%s3 + $0x30] sm:$0xff]
    %v57 = vld [vmem:[%s3 + $0x38] sm:$0xff]
    %v58 = vld [vmem:[%s3 + $0x40] sm:$0xff]
    %v59 = vld [vmem:[%s3 + $0x48] sm:$0xff]
    %v60 = vld [vmem:[%s3 + $0x50] sm:$0xff]
    %v61 = vld [vmem:[%s3 + $0x58] sm:$0xff]
    %v62 = vld [vmem:[%s3 + $0x60] sm:$0xff]
    %v63 = vld [vmem:[%s3 + $0x68] sm:$0xff]
    %v64 = vld [vmem:[%s3 + $0x70] sm:$0xff]
    %v65 = vld [vmem:[%s3 + $0x78] sm:$0xff]
    %v66 = vsub.f32 0.0, %v50
    %v67 = vsub.f32 0.0, %v51
    %v68 = vsub.f32 0.0, %v52
    %v69 = vsub.f32 0.0, %v53
    %v70 = vsub.f32 0.0, %v54
    %v71 = vsub.f32 0.0, %v55
    %v72 = vsub.f32 0.0, %v56
    %v73 = vsub.f32 0.0, %v57
    %v74 = vsub.f32 0.0, %v58
    %v75 = vsub.f32 0.0, %v59
    %v76 = vsub.f32 0.0, %v60
    %v77 = vsub.f32 0.0, %v61
    %v78 = vsub.f32 0.0, %v62
    %v79 = vsub.f32 0.0, %v63
    %v80 = vsub.f32 0.0, %v64
    %v81 = vsub.f32 0.0, %v65
    %v82 = vmul.f32 %v66, 1.442695
    %v83 = vpow.pop %v82
    %v84 = vmul.f32 %v67, 1.442695
    %v85 = vpow.pop %v84
    %v86 = vmul.f32 %v68, 1.442695
    %v87 = vpow.pop %v86
    %v88 = vmul.f32 %v69, 1.442695
    %v89 = vpow.pop %v88
    %v90 = vmul.f32 %v70, 1.442695
    %v91 = vpow.pop %v90
    %v92 = vmul.f32 %v71, 1.442695
    %v93 = vpow.pop %v92
    %v94 = vmul.f32 %v72, 1.442695
    %v95 = vpow.pop %v94
    %v96 = vmul.f32 %v73, 1.442695
    %v97 = vpow.pop %v96
    %v98 = vmul.f32 %v74, 1.442695
    %v99 = vpow.pop %v98
    %v100 = vmul.f32 %v75, 1.442695
    %v101 = vpow.pop %v100
    %v102 = vmul.f32 %v76, 1.442695
    %v103 = vpow.pop %v102
    %v104 = vmul.f32 %v77, 1.442695
    %v105 = vpow.pop %v104
    %v106 = vmul.f32 %v78, 1.442695
    %v107 = vpow.pop %v106
    %v108 = vmul.f32 %v79, 1.442695
    %v109 = vpow.pop %v108
    %v110 = vmul.f32 %v80, 1.442695
    %v111 = vpow.pop %v110
    %v112 = vmul.f32 %v81, 1.442695
    %v113 = vpow.pop %v112
    %v114 = vadd.f32 %v83, 1.0
    %v115 = vadd.f32 %v85, 1.0
    %v116 = vadd.f32 %v87, 1.0
    %v117 = vadd.f32 %v89, 1.0
    %v118 = vadd.f32 %v91, 1.0
    %v119 = vadd.f32 %v93, 1.0
    %v120 = vadd.f32 %v95, 1.0
    %v121 = vadd.f32 %v97, 1.0
    %v122 = vadd.f32 %v99, 1.0
    %v123 = vadd.f32 %v101, 1.0
    %v124 = vadd.f32 %v103, 1.0
    %v125 = vadd.f32 %v105, 1.0
    %v126 = vadd.f32 %v107, 1.0
    %v127 = vadd.f32 %v109, 1.0
    %v128 = vadd.f32 %v111, 1.0
    %v129 = vadd.f32 %v113, 1.0
    %v130 = vrcp.pop %v114
    %v131 = vmul.f32 1.0, %v130
    %v132 = vrcp.pop %v115
    %v133 = vmul.f32 1.0, %v132
    %v134 = vrcp.pop %v116
    %v135 = vmul.f32 1.0, %v134
    %v136 = vrcp.pop %v117
    %v137 = vmul.f32 1.0, %v136
    %v138 = vrcp.pop %v118
    %v139 = vmul.f32 1.0, %v138
    %v140 = vrcp.pop %v119
    %v141 = vmul.f32 1.0, %v140
    %v142 = vrcp.pop %v120
    %v143 = vmul.f32 1.0, %v142
    %v144 = vrcp.pop %v121
    %v145 = vmul.f32 1.0, %v144
    %v146 = vrcp.pop %v122
    %v147 = vmul.f32 1.0, %v146
    %v148 = vrcp.pop %v123
    %v149 = vmul.f32 1.0, %v148
    %v150 = vrcp.pop %v124
    %v151 = vmul.f32 1.0, %v150
    %v152 = vrcp.pop %v125
    %v153 = vmul.f32 1.0, %v152
    %v154 = vrcp.pop %v126
    %v155 = vmul.f32 1.0, %v154
    %v156 = vrcp.pop %v127
    %v157 = vmul.f32 1.0, %v156
    %v158 = vrcp.pop %v128
    %v159 = vmul.f32 1.0, %v158
    %v160 = vrcp.pop %v129
    %v161 = vmul.f32 1.0, %v160
    %v162 = vld [vmem:[%s2] sm:$0xff]
    %v163 = vld [vmem:[%s2 + $0x8] sm:$0xff]
    %v164 = vld [vmem:[%s2 + $0x10] sm:$0xff]
    %v165 = vld [vmem:[%s2 + $0x18] sm:$0xff]
    %v166 = vld [vmem:[%s2 + $0x20] sm:$0xff]
    %v167 = vld [vmem:[%s2 + $0x28] sm:$0xff]
    %v168 = vld [vmem:[%s2 + $0x30] sm:$0xff]
    %v169 = vld [vmem:[%s2 + $0x38] sm:$0xff]
    %v170 = vld [vmem:[%s2 + $0x40] sm:$0xff]
    %v171 = vld [vmem:[%s2 + $0x48] sm:$0xff]
    %v172 = vld [vmem:[%s2 + $0x50] sm:$0xff]
    %v173 = vld [vmem:[%s2 + $0x58] sm:$0xff]
    %v174 = vld [vmem:[%s2 + $0x60] sm:$0xff]
    %v175 = vld [vmem:[%s2 + $0x68] sm:$0xff]
    %v176 = vld [vmem:[%s2 + $0x70] sm:$0xff]
    %v177 = vld [vmem:[%s2 + $0x78] sm:$0xff]
    %vm178 = vcmp.gt.f32.partialorder %v162, 20.0
    %vm179 = vcmp.gt.f32.partialorder %v163, 20.0
    %vm180 = vcmp.gt.f32.partialorder %v164, 20.0
    %vm181 = vcmp.gt.f32.partialorder %v165, 20.0
    %vm182 = vcmp.gt.f32.partialorder %v166, 20.0
    %vm183 = vcmp.gt.f32.partialorder %v167, 20.0
    %vm184 = vcmp.gt.f32.partialorder %v168, 20.0
    %vm185 = vcmp.gt.f32.partialorder %v169, 20.0
    %vm186 = vcmp.gt.f32.partialorder %v170, 20.0
    %vm187 = vcmp.gt.f32.partialorder %v171, 20.0
    %vm188 = vcmp.gt.f32.partialorder %v172, 20.0
    %vm189 = vcmp.gt.f32.partialorder %v173, 20.0
    %vm190 = vcmp.gt.f32.partialorder %v174, 20.0
    %vm191 = vcmp.gt.f32.partialorder %v175, 20.0
    %vm192 = vcmp.gt.f32.partialorder %v176, 20.0
    %vm193 = vcmp.gt.f32.partialorder %v177, 20.0
    %v194 = vmin.f32 %v162, 20.0
    %v195 = vmin.f32 %v163, 20.0
    %v196 = vmin.f32 %v164, 20.0
    %v197 = vmin.f32 %v165, 20.0
    %v198 = vmin.f32 %v166, 20.0
    %v199 = vmin.f32 %v167, 20.0
    %v200 = vmin.f32 %v168, 20.0
    %v201 = vmin.f32 %v169, 20.0
    %v202 = vmin.f32 %v170, 20.0
    %v203 = vmin.f32 %v171, 20.0
    %v204 = vmin.f32 %v172, 20.0
    %v205 = vmin.f32 %v173, 20.0
    %v206 = vmin.f32 %v174, 20.0
    %v207 = vmin.f32 %v175, 20.0
    %v208 = vmin.f32 %v176, 20.0
    %v209 = vmin.f32 %v177, 20.0
    %v210 = vmul.f32 %v194, 1.442695
    %v211 = vpow.pop %v210
    %v212 = vmul.f32 %v195, 1.442695
    %v213 = vpow.pop %v212
    %v214 = vmul.f32 %v196, 1.442695
    %v215 = vpow.pop %v214
    %v216 = vmul.f32 %v197, 1.442695
    %v217 = vpow.pop %v216
    %v218 = vmul.f32 %v198, 1.442695
    %v219 = vpow.pop %v218
    %v220 = vmul.f32 %v199, 1.442695
    %v221 = vpow.pop %v220
    %v222 = vmul.f32 %v200, 1.442695
    %v223 = vpow.pop %v222
    %v224 = vmul.f32 %v201, 1.442695
    %v225 = vpow.pop %v224
    %v226 = vmul.f32 %v202, 1.442695
    %v227 = vpow.pop %v226
    %v228 = vmul.f32 %v203, 1.442695
    %v229 = vpow.pop %v228
    %v230 = vmul.f32 %v204, 1.442695
    %v231 = vpow.pop %v230
    %v232 = vmul.f32 %v205, 1.442695
    %v233 = vpow.pop %v232
    %v234 = vmul.f32 %v206, 1.442695
    %v235 = vpow.pop %v234
    %v236 = vmul.f32 %v207, 1.442695
    %v237 = vpow.pop %v236
    %v238 = vmul.f32 %v208, 1.442695
    %v239 = vpow.pop %v238
    %v240 = vmul.f32 %v209, 1.442695
    %v241 = vpow.pop %v240
    %v242 = vadd.f32 %v211, 1.0
    %v243 = vlog2.pop %v242
    %v244 = vmul.f32 %v243, 0.6931472
    %v245 = vmul.f32 -0.5, %v211
    %v246 = vadd.f32 %v245, 1.0
    %v247 = vmul.f32 %v246, %v211
    %v248 = vand.u32 2147483647, %v211
    %vm249 = vcmp.lt.f32.partialorder %v248, 0.0004427343
    %v250 = vsel %vm249, %v247, %v244
    %v251 = vadd.f32 %v213, 1.0
    %v252 = vlog2.pop %v251
    %v253 = vmul.f32 %v252, 0.6931472
    %v254 = vmul.f32 -0.5, %v213
    %v255 = vadd.f32 %v254, 1.0
    %v256 = vmul.f32 %v255, %v213
    %v257 = vand.u32 2147483647, %v213
    %vm258 = vcmp.lt.f32.partialorder %v257, 0.0004427343
    %v259 = vsel %vm258, %v256, %v253
    %v260 = vadd.f32 %v215, 1.0
    %v261 = vlog2.pop %v260
    %v262 = vmul.f32 %v261, 0.6931472
    %v263 = vmul.f32 -0.5, %v215
    %v264 = vadd.f32 %v263, 1.0
    %v265 = vmul.f32 %v264, %v215
    %v266 = vand.u32 2147483647, %v215
    %vm267 = vcmp.lt.f32.partialorder %v266, 0.0004427343
    %v268 = vsel %vm267, %v265, %v262
    %v269 = vadd.f32 %v217, 1.0
    %v270 = vlog2.pop %v269
    %v271 = vmul.f32 %v270, 0.6931472
    %v272 = vmul.f32 -0.5, %v217
    %v273 = vadd.f32 %v272, 1.0
    %v274 = vmul.f32 %v273, %v217
    %v275 = vand.u32 2147483647, %v217
    %vm276 = vcmp.lt.f32.partialorder %v275, 0.0004427343
    %v277 = vsel %vm276, %v274, %v271
    %v278 = vadd.f32 %v219, 1.0
    %v279 = vlog2.pop %v278
    %v280 = vmul.f32 %v279, 0.6931472
    %v281 = vmul.f32 -0.5, %v219
    %v282 = vadd.f32 %v281, 1.0
    %v283 = vmul.f32 %v282, %v219
    %v284 = vand.u32 2147483647, %v219
    %vm285 = vcmp.lt.f32.partialorder %v284, 0.0004427343
    %v286 = vsel %vm285, %v283, %v280
    %v287 = vadd.f32 %v221, 1.0
    %v288 = vlog2.pop %v287
    %v289 = vmul.f32 %v288, 0.6931472
    %v290 = vmul.f32 -0.5, %v221
    %v291 = vadd.f32 %v290, 1.0
    %v292 = vmul.f32 %v291, %v221
    %v293 = vand.u32 2147483647, %v221
    %vm294 = vcmp.lt.f32.partialorder %v293, 0.0004427343
    %v295 = vsel %vm294, %v292, %v289
    %v296 = vadd.f32 %v223, 1.0
    %v297 = vlog2.pop %v296
    %v298 = vmul.f32 %v297, 0.6931472
    %v299 = vmul.f32 -0.5, %v223
    %v300 = vadd.f32 %v299, 1.0
    %v301 = vmul.f32 %v300, %v223
    %v302 = vand.u32 2147483647, %v223
    %vm303 = vcmp.lt.f32.partialorder %v302, 0.0004427343
    %v304 = vsel %vm303, %v301, %v298
    %v305 = vadd.f32 %v225, 1.0
    %v306 = vlog2.pop %v305
    %v307 = vmul.f32 %v306, 0.6931472
    %v308 = vmul.f32 -0.5, %v225
    %v309 = vadd.f32 %v308, 1.0
    %v310 = vmul.f32 %v309, %v225
    %v311 = vand.u32 2147483647, %v225
    %vm312 = vcmp.lt.f32.partialorder %v311, 0.0004427343
    %v313 = vsel %vm312, %v310, %v307
    %v314 = vadd.f32 %v227, 1.0
    %v315 = vlog2.pop %v314
    %v316 = vmul.f32 %v315, 0.6931472
    %v317 = vmul.f32 -0.5, %v227
    %v318 = vadd.f32 %v317, 1.0
    %v319 = vmul.f32 %v318, %v227
    %v320 = vand.u32 2147483647, %v227
    %vm321 = vcmp.lt.f32.partialorder %v320, 0.0004427343
    %v322 = vsel %vm321, %v319, %v316
    %v323 = vadd.f32 %v229, 1.0
    %v324 = vlog2.pop %v323
    %v325 = vmul.f32 %v324, 0.6931472
    %v326 = vmul.f32 -0.5, %v229
    %v327 = vadd.f32 %v326, 1.0
    %v328 = vmul.f32 %v327, %v229
    %v329 = vand.u32 2147483647, %v229
    %vm330 = vcmp.lt.f32.partialorder %v329, 0.0004427343
    %v331 = vsel %vm330, %v328, %v325
    %v332 = vadd.f32 %v231, 1.0
    %v333 = vlog2.pop %v332
    %v334 = vmul.f32 %v333, 0.6931472
    %v335 = vmul.f32 -0.5, %v231
    %v336 = vadd.f32 %v335, 1.0
    %v337 = vmul.f32 %v336, %v231
    %v338 = vand.u32 2147483647, %v231
    %vm339 = vcmp.lt.f32.partialorder %v338, 0.0004427343
    %v340 = vsel %vm339, %v337, %v334
    %v341 = vadd.f32 %v233, 1.0
    %v342 = vlog2.pop %v341
    %v343 = vmul.f32 %v342, 0.6931472
    %v344 = vmul.f32 -0.5, %v233
    %v345 = vadd.f32 %v344, 1.0
    %v346 = vmul.f32 %v345, %v233
    %v347 = vand.u32 2147483647, %v233
    %vm348 = vcmp.lt.f32.partialorder %v347, 0.0004427343
    %v349 = vsel %vm348, %v346, %v343
    %v350 = vadd.f32 %v235, 1.0
    %v351 = vlog2.pop %v350
    %v352 = vmul.f32 %v351, 0.6931472
    %v353 = vmul.f32 -0.5, %v235
    %v354 = vadd.f32 %v353, 1.0
    %v355 = vmul.f32 %v354, %v235
    %v356 = vand.u32 2147483647, %v235
    %vm357 = vcmp.lt.f32.partialorder %v356, 0.0004427343
    %v358 = vsel %vm357, %v355, %v352
    %v359 = vadd.f32 %v237, 1.0
    %v360 = vlog2.pop %v359
    %v361 = vmul.f32 %v360, 0.6931472
    %v362 = vmul.f32 -0.5, %v237
    %v363 = vadd.f32 %v362, 1.0
    %v364 = vmul.f32 %v363, %v237
    %v365 = vand.u32 2147483647, %v237
    %vm366 = vcmp.lt.f32.partialorder %v365, 0.0004427343
    %v367 = vsel %vm366, %v364, %v361
    %v368 = vadd.f32 %v239, 1.0
    %v369 = vlog2.pop %v368
    %v370 = vmul.f32 %v369, 0.6931472
    %v371 = vmul.f32 -0.5, %v239
    %v372 = vadd.f32 %v371, 1.0
    %v373 = vmul.f32 %v372, %v239
    %v374 = vand.u32 2147483647, %v239
    %vm375 = vcmp.lt.f32.partialorder %v374, 0.0004427343
    %v376 = vsel %vm375, %v373, %v370
    %v377 = vadd.f32 %v241, 1.0
    %v378 = vlog2.pop %v377
    %v379 = vmul.f32 %v378, 0.6931472
    %v380 = vmul.f32 -0.5, %v241
    %v381 = vadd.f32 %v380, 1.0
    %v382 = vmul.f32 %v381, %v241
    %v383 = vand.u32 2147483647, %v241
    %vm384 = vcmp.lt.f32.partialorder %v383, 0.0004427343
    %v385 = vsel %vm384, %v382, %v379
    %v386 = vsel %vm178, %v162, %v250
    %v387 = vsel %vm179, %v163, %v259
    %v388 = vsel %vm180, %v164, %v268
    %v389 = vsel %vm181, %v165, %v277
    %v390 = vsel %vm182, %v166, %v286
    %v391 = vsel %vm183, %v167, %v295
    %v392 = vsel %vm184, %v168, %v304
    %v393 = vsel %vm185, %v169, %v313
    %v394 = vsel %vm186, %v170, %v322
    %v395 = vsel %vm187, %v171, %v331
    %v396 = vsel %vm188, %v172, %v340
    %v397 = vsel %vm189, %v173, %v349
    %v398 = vsel %vm190, %v174, %v358
    %v399 = vsel %vm191, %v175, %v367
    %v400 = vsel %vm192, %v176, %v376
    %v401 = vsel %vm193, %v177, %v385
    %v402 = vmul.f32 %v34, %v131
    %v403 = vmul.f32 %v35, %v133
    %v404 = vmul.f32 %v36, %v135
    %v405 = vmul.f32 %v37, %v137
    %v406 = vmul.f32 %v38, %v139
    %v407 = vmul.f32 %v39, %v141
    %v408 = vmul.f32 %v40, %v143
    %v409 = vmul.f32 %v41, %v145
    %v410 = vmul.f32 %v42, %v147
    %v411 = vmul.f32 %v43, %v149
    %v412 = vmul.f32 %v44, %v151
    %v413 = vmul.f32 %v45, %v153
    %v414 = vmul.f32 %v46, %v155
    %v415 = vmul.f32 %v47, %v157
    %v416 = vmul.f32 %v48, %v159
    %v417 = vmul.f32 %v49, %v161
    %v418 = vmul.f32 %v386, %v386
    %v419 = vmul.f32 %v387, %v387
    %v420 = vmul.f32 %v388, %v388
    %v421 = vmul.f32 %v389, %v389
    %v422 = vmul.f32 %v390, %v390
    %v423 = vmul.f32 %v391, %v391
    %v424 = vmul.f32 %v392, %v392
    %v425 = vmul.f32 %v393, %v393
    %v426 = vmul.f32 %v394, %v394
    %v427 = vmul.f32 %v395, %v395
    %v428 = vmul.f32 %v396, %v396
    %v429 = vmul.f32 %v397, %v397
    %v430 = vmul.f32 %v398, %v398
    %v431 = vmul.f32 %v399, %v399
    %v432 = vmul.f32 %v400, %v400
    %v433 = vmul.f32 %v401, %v401
    %v434 = vsub.f32 1.0, %v131
    %v435 = vsub.f32 1.0, %v133
    %v436 = vsub.f32 1.0, %v135
    %v437 = vsub.f32 1.0, %v137
    %v438 = vsub.f32 1.0, %v139
    %v439 = vsub.f32 1.0, %v141
    %v440 = vsub.f32 1.0, %v143
    %v441 = vsub.f32 1.0, %v145
    %v442 = vsub.f32 1.0, %v147
    %v443 = vsub.f32 1.0, %v149
    %v444 = vsub.f32 1.0, %v151
    %v445 = vsub.f32 1.0, %v153
    %v446 = vsub.f32 1.0, %v155
    %v447 = vsub.f32 1.0, %v157
    %v448 = vsub.f32 1.0, %v159
    %v449 = vsub.f32 1.0, %v161
    %v450 = vmul.f32 %v34, %v34
    %v451 = vmul.f32 %v35, %v35
    %v452 = vmul.f32 %v36, %v36
    %v453 = vmul.f32 %v37, %v37
    %v454 = vmul.f32 %v38, %v38
    %v455 = vmul.f32 %v39, %v39
    %v456 = vmul.f32 %v40, %v40
    %v457 = vmul.f32 %v41, %v41
    %v458 = vmul.f32 %v42, %v42
    %v459 = vmul.f32 %v43, %v43
    %v460 = vmul.f32 %v44, %v44
    %v461 = vmul.f32 %v45, %v45
    %v462 = vmul.f32 %v46, %v46
    %v463 = vmul.f32 %v47, %v47
    %v464 = vmul.f32 %v48, %v48
    %v465 = vmul.f32 %v49, %v49
    %v466 = vmul.f32 %v434, %v450
    %v467 = vmul.f32 %v435, %v451
    %v468 = vmul.f32 %v436, %v452
    %v469 = vmul.f32 %v437, %v453
    %v470 = vmul.f32 %v438, %v454
    %v471 = vmul.f32 %v439, %v455
    %v472 = vmul.f32 %v440, %v456
    %v473 = vmul.f32 %v441, %v457
    %v474 = vmul.f32 %v442, %v458
    %v475 = vmul.f32 %v443, %v459
    %v476 = vmul.f32 %v444, %v460
    %v477 = vmul.f32 %v445, %v461
    %v478 = vmul.f32 %v446, %v462
    %v479 = vmul.f32 %v447, %v463
    %v480 = vmul.f32 %v448, %v464
    %v481 = vmul.f32 %v449, %v465
    %v482 = vadd.f32 %v418, %v466
    %v483 = vadd.f32 %v419, %v467
    %v484 = vadd.f32 %v420, %v468
    %v485 = vadd.f32 %v421, %v469
    %v486 = vadd.f32 %v422, %v470
    %v487 = vadd.f32 %v423, %v471
    %v488 = vadd.f32 %v424, %v472
    %v489 = vadd.f32 %v425, %v473
    %v490 = vadd.f32 %v426, %v474
    %v491 = vadd.f32 %v427, %v475
    %v492 = vadd.f32 %v428, %v476
    %v493 = vadd.f32 %v429, %v477
    %v494 = vadd.f32 %v430, %v478
    %v495 = vadd.f32 %v431, %v479
    %v496 = vadd.f32 %v432, %v480
    %v497 = vadd.f32 %v433, %v481
    %v498 = vmul.f32 %v131, %v482
    %v499 = vmul.f32 %v133, %v483
    %v500 = vmul.f32 %v135, %v484
    %v501 = vmul.f32 %v137, %v485
    %v502 = vmul.f32 %v139, %v486
    %v503 = vmul.f32 %v141, %v487
    %v504 = vmul.f32 %v143, %v488
    %v505 = vmul.f32 %v145, %v489
    %v506 = vmul.f32 %v147, %v490
    %v507 = vmul.f32 %v149, %v491
    %v508 = vmul.f32 %v151, %v492
    %v509 = vmul.f32 %v153, %v493
    %v510 = vmul.f32 %v155, %v494
    %v511 = vmul.f32 %v157, %v495
    %v512 = vmul.f32 %v159, %v496
    %v513 = vmul.f32 %v161, %v497
    %v514 = vld [vmem:[#allocation2] sm:$0xff]
    %515 = vmatprep.subr.mxu0 0.0
    %516 = vmatpush1.xpose.msra.mxu0 %v402
    %517 = vmatprep.subr.mxu0 0.0
    %518 = vmatpush1.xpose.msra.mxu0 %v403
    %519 = vmatprep.subr.mxu0 0.0
    %520 = vmatpush1.xpose.msra.mxu0 %v404
    %521 = vmatprep.subr.mxu0 0.0
    %522 = vmatpush1.xpose.msra.mxu0 %v405
    %523 = vmatprep.subr.mxu0 0.0
    %524 = vmatpush1.xpose.msra.mxu0 %v406
    %525 = vmatprep.subr.mxu0 0.0
    %526 = vmatpush1.xpose.msra.mxu0 %v407
    %527 = vmatprep.subr.mxu0 0.0
    %528 = vmatpush1.xpose.msra.mxu0 %v408
    %529 = vmatprep.subr.mxu0 0.0
    %530 = vmatpush1.xpose.msra.mxu0 %v409
    %531 = vmatprep.subr.mxu0 0.0
    %532 = vmatpush1.xpose.msra.mxu0 %v410
    %533 = vmatprep.subr.mxu0 0.0
    %534 = vmatpush1.xpose.msra.mxu0 %v411
    %535 = vmatprep.subr.mxu0 0.0
    %536 = vmatpush1.xpose.msra.mxu0 %v412
    %537 = vmatprep.subr.mxu0 0.0
    %538 = vmatpush1.xpose.msra.mxu0 %v413
    %539 = vmatprep.subr.mxu0 0.0
    %540 = vmatpush1.xpose.msra.mxu0 %v414
    %541 = vmatprep.subr.mxu0 0.0
    %542 = vmatpush1.xpose.msra.mxu0 %v415
    %543 = vmatprep.subr.mxu0 0.0
    %544 = vmatpush1.xpose.msra.mxu0 %v416
    %545 = vmatprep.subr.mxu0 0.0
    %546 = vmatpush1.xpose.msra.mxu0 %v417
    %547 = vmatprep.subr.mxu0 0.0
    %548 = vmatpush1.xpose.msra.mxu0 0.0
    %549 = vmatprep.subr.mxu0 0.0
    %550 = vmatpush1.xpose.msra.mxu0 0.0
    %551 = vmatprep.subr.mxu0 0.0
    %552 = vmatpush1.xpose.msra.mxu0 0.0
    %553 = vmatprep.subr.mxu0 0.0
    %554 = vmatpush1.xpose.msra.mxu0 0.0
    %555 = vmatprep.subr.mxu0 0.0
    %556 = vmatpush1.xpose.msra.mxu0 0.0
    %557 = vmatprep.subr.mxu0 0.0
    %558 = vmatpush1.xpose.msra.mxu0 0.0
    %559 = vmatprep.subr.mxu0 0.0
    %560 = vmatpush1.xpose.msra.mxu0 0.0
    %561 = vmatprep.subr.mxu0 0.0
    %562 = vmatpush1.xpose.msra.mxu0 0.0
    %563 = vmatprep.subr.mxu0 0.0
    %564 = vmatpush1.xpose.msra.mxu0 0.0
    %565 = vmatprep.subr.mxu0 0.0
    %566 = vmatpush1.xpose.msra.mxu0 0.0
    %567 = vmatprep.subr.mxu0 0.0
    %568 = vmatpush1.xpose.msra.mxu0 0.0
    %569 = vmatprep.subr.mxu0 0.0
    %570 = vmatpush1.xpose.msra.mxu0 0.0
    %571 = vmatprep.subr.mxu0 0.0
    %572 = vmatpush1.xpose.msra.mxu0 0.0
    %573 = vmatprep.subr.mxu0 0.0
    %574 = vmatpush1.xpose.msra.mxu0 0.0
    %575 = vmatprep.subr.mxu0 0.0
    %576 = vmatpush1.xpose.msra.mxu0 0.0
    %577 = vmatprep.subr.mxu0 0.0
    %578 = vmatpush1.xpose.msra.mxu0 0.0
    %579 = vmatprep.mubr.f32.mxu0 0.0
    %580 = vmatmul.mubr.f32.gmra.mrb[0].mxu0 %v33
    %v581 = vpop.f32.mrb[0].mxu0
    %v582 = vadd.f32 0.0, %v581
    %v583 = vpop.f32.mrb[0].mxu0
    %584 = vdwg.mxu0
    %v585 = vadd.f32 %v514, %v582
    %586 = vst [vmem:[#allocation2] sm:$0xff] %v585
    %v587 = vld [vmem:[#allocation3] sm:$0xff]
    %v588 = vmul.f32 %v33, %v33
    %589 = vmatprep.subr.mxu0 0.0
    %590 = vmatpush1.xpose.msra.mxu0 %v498
    %591 = vmatprep.subr.mxu0 0.0
    %592 = vmatpush1.xpose.msra.mxu0 %v499
    %593 = vmatprep.subr.mxu0 0.0
    %594 = vmatpush1.xpose.msra.mxu0 %v500
    %595 = vmatprep.subr.mxu0 0.0
    %596 = vmatpush1.xpose.msra.mxu0 %v501
    %597 = vmatprep.subr.mxu0 0.0
    %598 = vmatpush1.xpose.msra.mxu0 %v502
    %599 = vmatprep.subr.mxu0 0.0
    %600 = vmatpush1.xpose.msra.mxu0 %v503
    %601 = vmatprep.subr.mxu0 0.0
    %602 = vmatpush1.xpose.msra.mxu0 %v504
    %603 = vmatprep.subr.mxu0 0.0
    %604 = vmatpush1.xpose.msra.mxu0 %v505
    %605 = vmatprep.subr.mxu0 0.0
    %606 = vmatpush1.xpose.msra.mxu0 %v506
    %607 = vmatprep.subr.mxu0 0.0
    %608 = vmatpush1.xpose.msra.mxu0 %v507
    %609 = vmatprep.subr.mxu0 0.0
    %610 = vmatpush1.xpose.msra.mxu0 %v508
    %611 = vmatprep.subr.mxu0 0.0
    %612 = vmatpush1.xpose.msra.mxu0 %v509
    %613 = vmatprep.subr.mxu0 0.0
    %614 = vmatpush1.xpose.msra.mxu0 %v510
    %615 = vmatprep.subr.mxu0 0.0
    %616 = vmatpush1.xpose.msra.mxu0 %v511
    %617 = vmatprep.subr.mxu0 0.0
    %618 = vmatpush1.xpose.msra.mxu0 %v512
    %619 = vmatprep.subr.mxu0 0.0
    %620 = vmatpush1.xpose.msra.mxu0 %v513
    %621 = vmatprep.subr.mxu0 0.0
    %622 = vmatpush1.xpose.msra.mxu0 0.0
    %623 = vmatprep.subr.mxu0 0.0
    %624 = vmatpush1.xpose.msra.mxu0 0.0
    %625 = vmatprep.subr.mxu0 0.0
    %626 = vmatpush1.xpose.msra.mxu0 0.0
    %627 = vmatprep.subr.mxu0 0.0
    %628 = vmatpush1.xpose.msra.mxu0 0.0
    %629 = vmatprep.subr.mxu0 0.0
    %630 = vmatpush1.xpose.msra.mxu0 0.0
    %631 = vmatprep.subr.mxu0 0.0
    %632 = vmatpush1.xpose.msra.mxu0 0.0
    %633 = vmatprep.subr.mxu0 0.0
    %634 = vmatpush1.xpose.msra.mxu0 0.0
    %635 = vmatprep.subr.mxu0 0.0
    %636 = vmatpush1.xpose.msra.mxu0 0.0
    %637 = vmatprep.subr.mxu0 0.0
    %638 = vmatpush1.xpose.msra.mxu0 0.0
    %639 = vmatprep.subr.mxu0 0.0
    %640 = vmatpush1.xpose.msra.mxu0 0.0
    %641 = vmatprep.subr.mxu0 0.0
    %642 = vmatpush1.xpose.msra.mxu0 0.0
    %643 = vmatprep.subr.mxu0 0.0
    %644 = vmatpush1.xpose.msra.mxu0 0.0
    %645 = vmatprep.subr.mxu0 0.0
    %646 = vmatpush1.xpose.msra.mxu0 0.0
    %647 = vmatprep.subr.mxu0 0.0
    %648 = vmatpush1.xpose.msra.mxu0 0.0
    %649 = vmatprep.subr.mxu0 0.0
    %650 = vmatpush1.xpose.msra.mxu0 0.0
    %651 = vmatprep.subr.mxu0 0.0
    %652 = vmatpush1.xpose.msra.mxu0 0.0
    %653 = vmatprep.mubr.f32.mxu0 0.0
    %654 = vmatmul.mubr.f32.gmra.mrb[0].mxu0 %v588
    %v655 = vpop.f32.mrb[0].mxu0
    %v656 = vadd.f32 0.0, %v655
    %v657 = vpop.f32.mrb[0].mxu0
    %658 = vdwg.mxu0
    %v659 = vadd.f32 %v587, %v656
    %660 = vst [vmem:[#allocation3] sm:$0xff] %v659
    // Predicated region
    $region34: #{bayesian_linear_forward.2} parent=1 // pred_check
      %p661 = pneg %p27
    $region35: #{bayesian_linear_forward.2} parent=1 // pred_check_branch
      %663 = sbr.rel (%p661) target = $region37
    $region36: #{bayesian_linear_forward.2} parent=1 // pred_region
      %v664 = vld [vmem:[%s5] sm:$0x1]
      %vm665 = vcmp.gt.f32.partialorder %v664, 20.0
      %v666 = vmin.f32 %v664, 20.0
      %v667 = vmul.f32 %v666, 1.442695
      %v668 = vpow.pop %v667
      %v669 = vadd.f32 %v668, 1.0
      %v670 = vlog2.pop %v669
      %v671 = vmul.f32 %v670, 0.6931472
      %v672 = vmul.f32 -0.5, %v668
      %v673 = vadd.f32 %v672, 1.0
      %v674 = vmul.f32 %v673, %v668
      %v675 = vand.u32 2147483647, %v668
      %vm676 = vcmp.lt.f32.partialorder %v675, 0.0004427343
      %v677 = vsel %vm676, %v674, %v671
      %v678 = vsel %vm665, %v664, %v677
      %v679 = vld [vmem:[#allocation3] sm:$0xff]
      %v680 = vmul.f32 %v678, %v678
      %v682 = vlaneseq
      %v683 = vshrl.u32 %v682, 7
      %v684 = vsub.s32 0, %v683
      %v685 = vrot.slane %v680, %v684
      %v687 = vadd.f32 %v679, %v685
      %v688 = vld [vmem:[#allocation2] sm:$0xff]
      %v689 = vld [vmem:[%s4] sm:$0x1]
      %v691 = vlaneseq
      %v692 = vshrl.u32 %v691, 7
      %v693 = vsub.s32 0, %v692
      %v694 = vrot.slane %v689, %v693
      %v696 = vadd.f32 %v688, %v694
      %v697 = vrsqrt.pop %v687
      %v698 = vmul.f32 %v687, %v697
      %vm699 = vcmp.eq.f32.partialorder %v687, inf
      %v700 = vsel %vm699, %v687, %v698
      %vm701 = vcmp.eq.f32.partialorder %v687, 0.0
      %v702 = vand.u32 %v687, 2147483648
      %v703 = vsel %vm701, %v702, %v700
      %v704 = vld [vmem:[%s6] sm:$0xff]
      %v705 = vmul.f32 %v703, %v704
      %v706 = vadd.f32 %v696, %v705
      %707 = vst [vmem:[#allocation4] sm:$0xff] %v706
    $region37: #{bayesian_linear_forward.2} parent=1 // pred_fallthru
      _
    // Predicated region
    $region38: #{bayesian_linear_forward.2} parent=1 // pred_check
      _
    $region39: #{bayesian_linear_forward.2} parent=1 // pred_check_branch
      %709 = sbr.rel (0) target = $region41
    $region40: #{bayesian_linear_forward.2} parent=1 // pred_region
      %s711 = ssub.s32 128, 128
      %712 = vsyncadd [#allocation5], %s711
      %s714 = sshll.u32 [#allocation4], 4
      %s715 = int_to_ptr.vmem [resolvable:$true] %s714
      %717 = dma.vmem_to_hbm [thread:$0]  %s715, 128, %s7, [#allocation5]
    $region41: #{bayesian_linear_forward.2} parent=1 // pred_fallthru
      _
    // Predicated region
    $region42: #{bayesian_linear_forward.2} parent=1 // pred_check
      _
    $region43: #{bayesian_linear_forward.2} parent=1 // pred_check_branch
      %719 = sbr.rel (0) target = $region45
    $region44: #{bayesian_linear_forward.2} parent=1 // pred_region
      %720 = dma.done [#allocation5], 128
    $region45: #{bayesian_linear_forward.2} parent=1 // pred_fallthru
      _
    %721 = vsyncpa [#allocation5], 1

// kernel: bayesian_linear_forward.3
$region0: #{bayesian_linear_forward.3}
  #allocation0 [shape = 'u32[]', space=smem, size = 0x4, offset = 0x4, fixed_abs, tag = 'smem constant byte address 0x4 - core index']
  #allocation1 [shape = 'u32[144,128]{1,0:T(1,128)}', space=vmem, size = 0x12000, scoped, tag = 'internal scratch']
  %s0 = inlined_call_operand.vmem [shape: f32[128,128], index: 0, kind: input, shape index: {}]
  %s1 = inlined_call_operand.vmem [shape: f32[128,128], index: 1, kind: input, shape index: {}]
  %s2 = inlined_call_operand.vmem [shape: f32[128,128], index: 2, kind: input, shape index: {}]
  %s3 = inlined_call_operand.vmem [shape: f32[1,128], index: 3, kind: input, shape index: {}]
  %s4 = inlined_call_operand.vmem [shape: f32[1,128], index: 4, kind: input, shape index: {}]
  %s5 = inlined_call_operand.hbm [shape: f32[1,1], index: 5, kind: output, shape index: {}]
  %s6 = sld [smem:[#allocation0]]
  $region38: #{bayesian_linear_forward.3} parent=0
    _
  %s8 = ssub.s32 1, %s6
  %s9 = scalar_select 0, %s8, %s6
  $region1: #{bayesian_linear_forward.3} parent=0
    #allocation2 [shape = 'u8[512]{0}', space=vmem, size = 0x400, scoped, tag = 'output window, operand 0, single buffered']
    #allocation3 [shape = 's32[1]{0}', space=sflag, size = 0x4, scoped, tag = 'scoped memory for bayesian_linear_forward.3']
    %10 = vsyncpa [#allocation3], 0
    // Predicated region
    $region2: #{bayesian_linear_forward.3} parent=1 // pred_check
      _
    $region3: #{bayesian_linear_forward.3} parent=1 // pred_check_branch
      %12 = sbr.rel (0) target = $region5
    $region4: #{bayesian_linear_forward.3} parent=1 // pred_region
      _
    $region5: #{bayesian_linear_forward.3} parent=1 // pred_fallthru
      _
    // Predicated region
    $region6: #{bayesian_linear_forward.3} parent=1 // pred_check
      _
    $region7: #{bayesian_linear_forward.3} parent=1 // pred_check_branch
      %14 = sbr.rel (0) target = $region9
    $region8: #{bayesian_linear_forward.3} parent=1 // pred_region
      _
    $region9: #{bayesian_linear_forward.3} parent=1 // pred_fallthru
      _
    // Predicated region
    $region10: #{bayesian_linear_forward.3} parent=1 // pred_check
      _
    $region11: #{bayesian_linear_forward.3} parent=1 // pred_check_branch
      %16 = sbr.rel (0) target = $region13
    $region12: #{bayesian_linear_forward.3} parent=1 // pred_region
      _
    $region13: #{bayesian_linear_forward.3} parent=1 // pred_fallthru
      _
    // Predicated region
    $region14: #{bayesian_linear_forward.3} parent=1 // pred_check
      _
    $region15: #{bayesian_linear_forward.3} parent=1 // pred_check_branch
      %18 = sbr.rel (0) target = $region17
    $region16: #{bayesian_linear_forward.3} parent=1 // pred_region
      _
    $region17: #{bayesian_linear_forward.3} parent=1 // pred_fallthru
      _
    // Predicated region
    $region18: #{bayesian_linear_forward.3} parent=1 // pred_check
      _
    $region19: #{bayesian_linear_forward.3} parent=1 // pred_check_branch
      %20 = sbr.rel (0) target = $region21
    $region20: #{bayesian_linear_forward.3} parent=1 // pred_region
      _
    $region21: #{bayesian_linear_forward.3} parent=1 // pred_fallthru
      _
    %p21 = scmp.eq.s32.totalorder 0, 0
    %p22 = scmp.eq.s32.totalorder 0, 0
    %p23 = pnand %p21, %p22
    %p24 = pneg %p23
    // Predicated region
    $region22: #{bayesian_linear_forward.3} parent=1 // pred_check
      _
    $region23: #{bayesian_linear_forward.3} parent=1 // pred_check_branch
      %26 = sbr.rel (%p23) target = $region25
    $region24: #{bayesian_linear_forward.3} parent=1 // pred_region
      %vm27 = vcmask 0
      %28 = vst.msk [vmem:[#allocation2] sm:$0x1] %vm27, 0.0
    $region25: #{bayesian_linear_forward.3} parent=1 // pred_fallthru
      _
    %v29 = vld [vmem:[%s0] sm:$0xff]
    %v30 = vld [vmem:[%s0 + $0x8] sm:$0xff]
    %v31 = vld [vmem:[%s0 + $0x10] sm:$0xff]
    %v32 = vld [vmem:[%s0 + $0x18] sm:$0xff]
    %v33 = vld [vmem:[%s0 + $0x20] sm:$0xff]
    %v34 = vld [vmem:[%s0 + $0x28] sm:$0xff]
    %v35 = vld [vmem:[%s0 + $0x30] sm:$0xff]
    %v36 = vld [vmem:[%s0 + $0x38] sm:$0xff]
    %v37 = vld [vmem:[%s0 + $0x40] sm:$0xff]
    %v38 = vld [vmem:[%s0 + $0x48] sm:$0xff]
    %v39 = vld [vmem:[%s0 + $0x50] sm:$0xff]
    %v40 = vld [vmem:[%s0 + $0x58] sm:$0xff]
    %v41 = vld [vmem:[%s0 + $0x60] sm:$0xff]
    %v42 = vld [vmem:[%s0 + $0x68] sm:$0xff]
    %v43 = vld [vmem:[%s0 + $0x70] sm:$0xff]
    %v44 = vld [vmem:[%s0 + $0x78] sm:$0xff]
    %v45 = vld [vmem:[%s2] sm:$0xff]
    %v46 = vld [vmem:[%s2 + $0x8] sm:$0xff]
    %v47 = vld [vmem:[%s2 + $0x10] sm:$0xff]
    %v48 = vld [vmem:[%s2 + $0x18] sm:$0xff]
    %v49 = vld [vmem:[%s2 + $0x20] sm:$0xff]
    %v50 = vld [vmem:[%s2 + $0x28] sm:$0xff]
    %v51 = vld [vmem:[%s2 + $0x30] sm:$0xff]
    %v52 = vld [vmem:[%s2 + $0x38] sm:$0xff]
    %v53 = vld [vmem:[%s2 + $0x40] sm:$0xff]
    %v54 = vld [vmem:[%s2 + $0x48] sm:$0xff]
    %v55 = vld [vmem:[%s2 + $0x50] sm:$0xff]
    %v56 = vld [vmem:[%s2 + $0x58] sm:$0xff]
    %v57 = vld [vmem:[%s2 + $0x60] sm:$0xff]
    %v58 = vld [vmem:[%s2 + $0x68] sm:$0xff]
    %v59 = vld [vmem:[%s2 + $0x70] sm:$0xff]
    %v60 = vld [vmem:[%s2 + $0x78] sm:$0xff]
    %v61 = vld [vmem:[%s1] sm:$0xff]
    %v62 = vld [vmem:[%s1 + $0x8] sm:$0xff]
    %v63 = vld [vmem:[%s1 + $0x10] sm:$0xff]
    %v64 = vld [vmem:[%s1 + $0x18] sm:$0xff]
    %v65 = vld [vmem:[%s1 + $0x20] sm:$0xff]
    %v66 = vld [vmem:[%s1 + $0x28] sm:$0xff]
    %v67 = vld [vmem:[%s1 + $0x30] sm:$0xff]
    %v68 = vld [vmem:[%s1 + $0x38] sm:$0xff]
    %v69 = vld [vmem:[%s1 + $0x40] sm:$0xff]
    %v70 = vld [vmem:[%s1 + $0x48] sm:$0xff]
    %v71 = vld [vmem:[%s1 + $0x50] sm:$0xff]
    %v72 = vld [vmem:[%s1 + $0x58] sm:$0xff]
    %v73 = vld [vmem:[%s1 + $0x60] sm:$0xff]
    %v74 = vld [vmem:[%s1 + $0x68] sm:$0xff]
    %v75 = vld [vmem:[%s1 + $0x70] sm:$0xff]
    %v76 = vld [vmem:[%s1 + $0x78] sm:$0xff]
    %vm77 = vcmp.gt.f32.partialorder %v61, 20.0
    %vm78 = vcmp.gt.f32.partialorder %v62, 20.0
    %vm79 = vcmp.gt.f32.partialorder %v63, 20.0
    %vm80 = vcmp.gt.f32.partialorder %v64, 20.0
    %vm81 = vcmp.gt.f32.partialorder %v65, 20.0
    %vm82 = vcmp.gt.f32.partialorder %v66, 20.0
    %vm83 = vcmp.gt.f32.partialorder %v67, 20.0
    %vm84 = vcmp.gt.f32.partialorder %v68, 20.0
    %vm85 = vcmp.gt.f32.partialorder %v69, 20.0
    %vm86 = vcmp.gt.f32.partialorder %v70, 20.0
    %vm87 = vcmp.gt.f32.partialorder %v71, 20.0
    %vm88 = vcmp.gt.f32.partialorder %v72, 20.0
    %vm89 = vcmp.gt.f32.partialorder %v73, 20.0
    %vm90 = vcmp.gt.f32.partialorder %v74, 20.0
    %vm91 = vcmp.gt.f32.partialorder %v75, 20.0
    %vm92 = vcmp.gt.f32.partialorder %v76, 20.0
    %v93 = vmin.f32 %v61, 20.0
    %v94 = vmin.f32 %v62, 20.0
    %v95 = vmin.f32 %v63, 20.0
    %v96 = vmin.f32 %v64, 20.0
    %v97 = vmin.f32 %v65, 20.0
    %v98 = vmin.f32 %v66, 20.0
    %v99 = vmin.f32 %v67, 20.0
    %v100 = vmin.f32 %v68, 20.0
    %v101 = vmin.f32 %v69, 20.0
    %v102 = vmin.f32 %v70, 20.0
    %v103 = vmin.f32 %v71, 20.0
    %v104 = vmin.f32 %v72, 20.0
    %v105 = vmin.f32 %v73, 20.0
    %v106 = vmin.f32 %v74, 20.0
    %v107 = vmin.f32 %v75, 20.0
    %v108 = vmin.f32 %v76, 20.0
    %v109 = vmul.f32 %v93, 1.442695
    %v110 = vpow.pop %v109
    %v111 = vmul.f32 %v94, 1.442695
    %v112 = vpow.pop %v111
    %v113 = vmul.f32 %v95, 1.442695
    %v114 = vpow.pop %v113
    %v115 = vmul.f32 %v96, 1.442695
    %v116 = vpow.pop %v115
    %v117 = vmul.f32 %v97, 1.442695
    %v118 = vpow.pop %v117
    %v119 = vmul.f32 %v98, 1.442695
    %v120 = vpow.pop %v119
    %v121 = vmul.f32 %v99, 1.442695
    %v122 = vpow.pop %v121
    %v123 = vmul.f32 %v100, 1.442695
    %v124 = vpow.pop %v123
    %v125 = vmul.f32 %v101, 1.442695
    %v126 = vpow.pop %v125
    %v127 = vmul.f32 %v102, 1.442695
    %v128 = vpow.pop %v127
    %v129 = vmul.f32 %v103, 1.442695
    %v130 = vpow.pop %v129
    %v131 = vmul.f32 %v104, 1.442695
    %v132 = vpow.pop %v131
    %v133 = vmul.f32 %v105, 1.442695
    %v134 = vpow.pop %v133
    %v135 = vmul.f32 %v106, 1.442695
    %v136 = vpow.pop %v135
    %v137 = vmul.f32 %v107, 1.442695
    %v138 = vpow.pop %v137
    %v139 = vmul.f32 %v108, 1.442695
    %v140 = vpow.pop %v139
    %v141 = vadd.f32 %v110, 1.0
    %v142 = vlog2.pop %v141
    %v143 = vmul.f32 %v142, 0.6931472
    %v144 = vmul.f32 -0.5, %v110
    %v145 = vadd.f32 %v144, 1.0
    %v146 = vmul.f32 %v145, %v110
    %v147 = vand.u32 2147483647, %v110
    %vm148 = vcmp.lt.f32.partialorder %v147, 0.0004427343
    %v149 = vsel %vm148, %v146, %v143
    %v150 = vadd.f32 %v112, 1.0
    %v151 = vlog2.pop %v150
    %v152 = vmul.f32 %v151, 0.6931472
    %v153 = vmul.f32 -0.5, %v112
    %v154 = vadd.f32 %v153, 1.0
    %v155 = vmul.f32 %v154, %v112
    %v156 = vand.u32 2147483647, %v112
    %vm157 = vcmp.lt.f32.partialorder %v156, 0.0004427343
    %v158 = vsel %vm157, %v155, %v152
    %v159 = vadd.f32 %v114, 1.0
    %v160 = vlog2.pop %v159
    %v161 = vmul.f32 %v160, 0.6931472
    %v162 = vmul.f32 -0.5, %v114
    %v163 = vadd.f32 %v162, 1.0
    %v164 = vmul.f32 %v163, %v114
    %v165 = vand.u32 2147483647, %v114
    %vm166 = vcmp.lt.f32.partialorder %v165, 0.0004427343
    %v167 = vsel %vm166, %v164, %v161
    %v168 = vadd.f32 %v116, 1.0
    %v169 = vlog2.pop %v168
    %v170 = vmul.f32 %v169, 0.6931472
    %v171 = vmul.f32 -0.5, %v116
    %v172 = vadd.f32 %v171, 1.0
    %v173 = vmul.f32 %v172, %v116
    %v174 = vand.u32 2147483647, %v116
    %vm175 = vcmp.lt.f32.partialorder %v174, 0.0004427343
    %v176 = vsel %vm175, %v173, %v170
    %v177 = vadd.f32 %v118, 1.0
    %v178 = vlog2.pop %v177
    %v179 = vmul.f32 %v178, 0.6931472
    %v180 = vmul.f32 -0.5, %v118
    %v181 = vadd.f32 %v180, 1.0
    %v182 = vmul.f32 %v181, %v118
    %v183 = vand.u32 2147483647, %v118
    %vm184 = vcmp.lt.f32.partialorder %v183, 0.0004427343
    %v185 = vsel %vm184, %v182, %v179
    %v186 = vadd.f32 %v120, 1.0
    %v187 = vlog2.pop %v186
    %v188 = vmul.f32 %v187, 0.6931472
    %v189 = vmul.f32 -0.5, %v120
    %v190 = vadd.f32 %v189, 1.0
    %v191 = vmul.f32 %v190, %v120
    %v192 = vand.u32 2147483647, %v120
    %vm193 = vcmp.lt.f32.partialorder %v192, 0.0004427343
    %v194 = vsel %vm193, %v191, %v188
    %v195 = vadd.f32 %v122, 1.0
    %v196 = vlog2.pop %v195
    %v197 = vmul.f32 %v196, 0.6931472
    %v198 = vmul.f32 -0.5, %v122
    %v199 = vadd.f32 %v198, 1.0
    %v200 = vmul.f32 %v199, %v122
    %v201 = vand.u32 2147483647, %v122
    %vm202 = vcmp.lt.f32.partialorder %v201, 0.0004427343
    %v203 = vsel %vm202, %v200, %v197
    %v204 = vadd.f32 %v124, 1.0
    %v205 = vlog2.pop %v204
    %v206 = vmul.f32 %v205, 0.6931472
    %v207 = vmul.f32 -0.5, %v124
    %v208 = vadd.f32 %v207, 1.0
    %v209 = vmul.f32 %v208, %v124
    %v210 = vand.u32 2147483647, %v124
    %vm211 = vcmp.lt.f32.partialorder %v210, 0.0004427343
    %v212 = vsel %vm211, %v209, %v206
    %v213 = vadd.f32 %v126, 1.0
    %v214 = vlog2.pop %v213
    %v215 = vmul.f32 %v214, 0.6931472
    %v216 = vmul.f32 -0.5, %v126
    %v217 = vadd.f32 %v216, 1.0
    %v218 = vmul.f32 %v217, %v126
    %v219 = vand.u32 2147483647, %v126
    %vm220 = vcmp.lt.f32.partialorder %v219, 0.0004427343
    %v221 = vsel %vm220, %v218, %v215
    %v222 = vadd.f32 %v128, 1.0
    %v223 = vlog2.pop %v222
    %v224 = vmul.f32 %v223, 0.6931472
    %v225 = vmul.f32 -0.5, %v128
    %v226 = vadd.f32 %v225, 1.0
    %v227 = vmul.f32 %v226, %v128
    %v228 = vand.u32 2147483647, %v128
    %vm229 = vcmp.lt.f32.partialorder %v228, 0.0004427343
    %v230 = vsel %vm229, %v227, %v224
    %v231 = vadd.f32 %v130, 1.0
    %v232 = vlog2.pop %v231
    %v233 = vmul.f32 %v232, 0.6931472
    %v234 = vmul.f32 -0.5, %v130
    %v235 = vadd.f32 %v234, 1.0
    %v236 = vmul.f32 %v235, %v130
    %v237 = vand.u32 2147483647, %v130
    %vm238 = vcmp.lt.f32.partialorder %v237, 0.0004427343
    %v239 = vsel %vm238, %v236, %v233
    %v240 = vadd.f32 %v132, 1.0
    %v241 = vlog2.pop %v240
    %v242 = vmul.f32 %v241, 0.6931472
    %v243 = vmul.f32 -0.5, %v132
    %v244 = vadd.f32 %v243, 1.0
    %v245 = vmul.f32 %v244, %v132
    %v246 = vand.u32 2147483647, %v132
    %vm247 = vcmp.lt.f32.partialorder %v246, 0.0004427343
    %v248 = vsel %vm247, %v245, %v242
    %v249 = vadd.f32 %v134, 1.0
    %v250 = vlog2.pop %v249
    %v251 = vmul.f32 %v250, 0.6931472
    %v252 = vmul.f32 -0.5, %v134
    %v253 = vadd.f32 %v252, 1.0
    %v254 = vmul.f32 %v253, %v134
    %v255 = vand.u32 2147483647, %v134
    %vm256 = vcmp.lt.f32.partialorder %v255, 0.0004427343
    %v257 = vsel %vm256, %v254, %v251
    %v258 = vadd.f32 %v136, 1.0
    %v259 = vlog2.pop %v258
    %v260 = vmul.f32 %v259, 0.6931472
    %v261 = vmul.f32 -0.5, %v136
    %v262 = vadd.f32 %v261, 1.0
    %v263 = vmul.f32 %v262, %v136
    %v264 = vand.u32 2147483647, %v136
    %vm265 = vcmp.lt.f32.partialorder %v264, 0.0004427343
    %v266 = vsel %vm265, %v263, %v260
    %v267 = vadd.f32 %v138, 1.0
    %v268 = vlog2.pop %v267
    %v269 = vmul.f32 %v268, 0.6931472
    %v270 = vmul.f32 -0.5, %v138
    %v271 = vadd.f32 %v270, 1.0
    %v272 = vmul.f32 %v271, %v138
    %v273 = vand.u32 2147483647, %v138
    %vm274 = vcmp.lt.f32.partialorder %v273, 0.0004427343
    %v275 = vsel %vm274, %v272, %v269
    %v276 = vadd.f32 %v140, 1.0
    %v277 = vlog2.pop %v276
    %v278 = vmul.f32 %v277, 0.6931472
    %v279 = vmul.f32 -0.5, %v140
    %v280 = vadd.f32 %v279, 1.0
    %v281 = vmul.f32 %v280, %v140
    %v282 = vand.u32 2147483647, %v140
    %vm283 = vcmp.lt.f32.partialorder %v282, 0.0004427343
    %v284 = vsel %vm283, %v281, %v278
    %v285 = vsel %vm77, %v61, %v149
    %v286 = vsel %vm78, %v62, %v158
    %v287 = vsel %vm79, %v63, %v167
    %v288 = vsel %vm80, %v64, %v176
    %v289 = vsel %vm81, %v65, %v185
    %v290 = vsel %vm82, %v66, %v194
    %v291 = vsel %vm83, %v67, %v203
    %v292 = vsel %vm84, %v68, %v212
    %v293 = vsel %vm85, %v69, %v221
    %v294 = vsel %vm86, %v70, %v230
    %v295 = vsel %vm87, %v71, %v239
    %v296 = vsel %vm88, %v72, %v248
    %v297 = vsel %vm89, %v73, %v257
    %v298 = vsel %vm90, %v74, %v266
    %v299 = vsel %vm91, %v75, %v275
    %v300 = vsel %vm92, %v76, %v284
    %v301 = vsub.f32 0.0, %v45
    %v302 = vsub.f32 0.0, %v46
    %v303 = vsub.f32 0.0, %v47
    %v304 = vsub.f32 0.0, %v48
    %v305 = vsub.f32 0.0, %v49
    %v306 = vsub.f32 0.0, %v50
    %v307 = vsub.f32 0.0, %v51
    %v308 = vsub.f32 0.0, %v52
    %v309 = vsub.f32 0.0, %v53
    %v310 = vsub.f32 0.0, %v54
    %v311 = vsub.f32 0.0, %v55
    %v312 = vsub.f32 0.0, %v56
    %v313 = vsub.f32 0.0, %v57
    %v314 = vsub.f32 0.0, %v58
    %v315 = vsub.f32 0.0, %v59
    %v316 = vsub.f32 0.0, %v60
    %vm317 = vcmp.gt.f32.partialorder %v301, 20.0
    %vm318 = vcmp.gt.f32.partialorder %v302, 20.0
    %vm319 = vcmp.gt.f32.partialorder %v303, 20.0
    %vm320 = vcmp.gt.f32.partialorder %v304, 20.0
    %vm321 = vcmp.gt.f32.partialorder %v305, 20.0
    %vm322 = vcmp.gt.f32.partialorder %v306, 20.0
    %vm323 = vcmp.gt.f32.partialorder %v307, 20.0
    %vm324 = vcmp.gt.f32.partialorder %v308, 20.0
    %vm325 = vcmp.gt.f32.partialorder %v309, 20.0
    %vm326 = vcmp.gt.f32.partialorder %v310, 20.0
    %vm327 = vcmp.gt.f32.partialorder %v311, 20.0
    %vm328 = vcmp.gt.f32.partialorder %v312, 20.0
    %vm329 = vcmp.gt.f32.partialorder %v313, 20.0
    %vm330 = vcmp.gt.f32.partialorder %v314, 20.0
    %vm331 = vcmp.gt.f32.partialorder %v315, 20.0
    %vm332 = vcmp.gt.f32.partialorder %v316, 20.0
    %v333 = vmin.f32 %v301, 20.0
    %v334 = vmin.f32 %v302, 20.0
    %v335 = vmin.f32 %v303, 20.0
    %v336 = vmin.f32 %v304, 20.0
    %v337 = vmin.f32 %v305, 20.0
    %v338 = vmin.f32 %v306, 20.0
    %v339 = vmin.f32 %v307, 20.0
    %v340 = vmin.f32 %v308, 20.0
    %v341 = vmin.f32 %v309, 20.0
    %v342 = vmin.f32 %v310, 20.0
    %v343 = vmin.f32 %v311, 20.0
    %v344 = vmin.f32 %v312, 20.0
    %v345 = vmin.f32 %v313, 20.0
    %v346 = vmin.f32 %v314, 20.0
    %v347 = vmin.f32 %v315, 20.0
    %v348 = vmin.f32 %v316, 20.0
    %v349 = vmul.f32 %v333, 1.442695
    %v350 = vpow.pop %v349
    %v351 = vmul.f32 %v334, 1.442695
    %v352 = vpow.pop %v351
    %v353 = vmul.f32 %v335, 1.442695
    %v354 = vpow.pop %v353
    %v355 = vmul.f32 %v336, 1.442695
    %v356 = vpow.pop %v355
    %v357 = vmul.f32 %v337, 1.442695
    %v358 = vpow.pop %v357
    %v359 = vmul.f32 %v338, 1.442695
    %v360 = vpow.pop %v359
    %v361 = vmul.f32 %v339, 1.442695
    %v362 = vpow.pop %v361
    %v363 = vmul.f32 %v340, 1.442695
    %v364 = vpow.pop %v363
    %v365 = vmul.f32 %v341, 1.442695
    %v366 = vpow.pop %v365
    %v367 = vmul.f32 %v342, 1.442695
    %v368 = vpow.pop %v367
    %v369 = vmul.f32 %v343, 1.442695
    %v370 = vpow.pop %v369
    %v371 = vmul.f32 %v344, 1.442695
    %v372 = vpow.pop %v371
    %v373 = vmul.f32 %v345, 1.442695
    %v374 = vpow.pop %v373
    %v375 = vmul.f32 %v346, 1.442695
    %v376 = vpow.pop %v375
    %v377 = vmul.f32 %v347, 1.442695
    %v378 = vpow.pop %v377
    %v379 = vmul.f32 %v348, 1.442695
    %v380 = vpow.pop %v379
    %v381 = vadd.f32 %v350, 1.0
    %v382 = vlog2.pop %v381
    %v383 = vmul.f32 %v382, 0.6931472
    %v384 = vmul.f32 -0.5, %v350
    %v385 = vadd.f32 %v384, 1.0
    %v386 = vmul.f32 %v385, %v350
    %v387 = vand.u32 2147483647, %v350
    %vm388 = vcmp.lt.f32.partialorder %v387, 0.0004427343
    %v389 = vsel %vm388, %v386, %v383
    %v390 = vadd.f32 %v352, 1.0
    %v391 = vlog2.pop %v390
    %v392 = vmul.f32 %v391, 0.6931472
    %v393 = vmul.f32 -0.5, %v352
    %v394 = vadd.f32 %v393, 1.0
    %v395 = vmul.f32 %v394, %v352
    %v396 = vand.u32 2147483647, %v352
    %vm397 = vcmp.lt.f32.partialorder %v396, 0.0004427343
    %v398 = vsel %vm397, %v395, %v392
    %v399 = vadd.f32 %v354, 1.0
    %v400 = vlog2.pop %v399
    %v401 = vmul.f32 %v400, 0.6931472
    %v402 = vmul.f32 -0.5, %v354
    %v403 = vadd.f32 %v402, 1.0
    %v404 = vmul.f32 %v403, %v354
    %v405 = vand.u32 2147483647, %v354
    %vm406 = vcmp.lt.f32.partialorder %v405, 0.0004427343
    %v407 = vsel %vm406, %v404, %v401
    %v408 = vadd.f32 %v356, 1.0
    %v409 = vlog2.pop %v408
    %v410 = vmul.f32 %v409, 0.6931472
    %v411 = vmul.f32 -0.5, %v356
    %v412 = vadd.f32 %v411, 1.0
    %v413 = vmul.f32 %v412, %v356
    %v414 = vand.u32 2147483647, %v356
    %vm415 = vcmp.lt.f32.partialorder %v414, 0.0004427343
    %v416 = vsel %vm415, %v413, %v410
    %v417 = vadd.f32 %v358, 1.0
    %v418 = vlog2.pop %v417
    %v419 = vmul.f32 %v418, 0.6931472
    %v420 = vmul.f32 -0.5, %v358
    %v421 = vadd.f32 %v420, 1.0
    %v422 = vmul.f32 %v421, %v358
    %v423 = vand.u32 2147483647, %v358
    %vm424 = vcmp.lt.f32.partialorder %v423, 0.0004427343
    %v425 = vsel %vm424, %v422, %v419
    %v426 = vadd.f32 %v360, 1.0
    %v427 = vlog2.pop %v426
    %v428 = vmul.f32 %v427, 0.6931472
    %v429 = vmul.f32 -0.5, %v360
    %v430 = vadd.f32 %v429, 1.0
    %v431 = vmul.f32 %v430, %v360
    %v432 = vand.u32 2147483647, %v360
    %vm433 = vcmp.lt.f32.partialorder %v432, 0.0004427343
    %v434 = vsel %vm433, %v431, %v428
    %v435 = vadd.f32 %v362, 1.0
    %v436 = vlog2.pop %v435
    %v437 = vmul.f32 %v436, 0.6931472
    %v438 = vmul.f32 -0.5, %v362
    %v439 = vadd.f32 %v438, 1.0
    %v440 = vmul.f32 %v439, %v362
    %v441 = vand.u32 2147483647, %v362
    %vm442 = vcmp.lt.f32.partialorder %v441, 0.0004427343
    %v443 = vsel %vm442, %v440, %v437
    %v444 = vadd.f32 %v364, 1.0
    %v445 = vlog2.pop %v444
    %v446 = vmul.f32 %v445, 0.6931472
    %v447 = vmul.f32 -0.5, %v364
    %v448 = vadd.f32 %v447, 1.0
    %v449 = vmul.f32 %v448, %v364
    %v450 = vand.u32 2147483647, %v364
    %vm451 = vcmp.lt.f32.partialorder %v450, 0.0004427343
    %v452 = vsel %vm451, %v449, %v446
    %v453 = vadd.f32 %v366, 1.0
    %v454 = vlog2.pop %v453
    %v455 = vmul.f32 %v454, 0.6931472
    %v456 = vmul.f32 -0.5, %v366
    %v457 = vadd.f32 %v456, 1.0
    %v458 = vmul.f32 %v457, %v366
    %v459 = vand.u32 2147483647, %v366
    %vm460 = vcmp.lt.f32.partialorder %v459, 0.0004427343
    %v461 = vsel %vm460, %v458, %v455
    %v462 = vadd.f32 %v368, 1.0
    %v463 = vlog2.pop %v462
    %v464 = vmul.f32 %v463, 0.6931472
    %v465 = vmul.f32 -0.5, %v368
    %v466 = vadd.f32 %v465, 1.0
    %v467 = vmul.f32 %v466, %v368
    %v468 = vand.u32 2147483647, %v368
    %vm469 = vcmp.lt.f32.partialorder %v468, 0.0004427343
    %v470 = vsel %vm469, %v467, %v464
    %v471 = vadd.f32 %v370, 1.0
    %v472 = vlog2.pop %v471
    %v473 = vmul.f32 %v472, 0.6931472
    %v474 = vmul.f32 -0.5, %v370
    %v475 = vadd.f32 %v474, 1.0
    %v476 = vmul.f32 %v475, %v370
    %v477 = vand.u32 2147483647, %v370
    %vm478 = vcmp.lt.f32.partialorder %v477, 0.0004427343
    %v479 = vsel %vm478, %v476, %v473
    %v480 = vadd.f32 %v372, 1.0
    %v481 = vlog2.pop %v480
    %v482 = vmul.f32 %v481, 0.6931472
    %v483 = vmul.f32 -0.5, %v372
    %v484 = vadd.f32 %v483, 1.0
    %v485 = vmul.f32 %v484, %v372
    %v486 = vand.u32 2147483647, %v372
    %vm487 = vcmp.lt.f32.partialorder %v486, 0.0004427343
    %v488 = vsel %vm487, %v485, %v482
    %v489 = vadd.f32 %v374, 1.0
    %v490 = vlog2.pop %v489
    %v491 = vmul.f32 %v490, 0.6931472
    %v492 = vmul.f32 -0.5, %v374
    %v493 = vadd.f32 %v492, 1.0
    %v494 = vmul.f32 %v493, %v374
    %v495 = vand.u32 2147483647, %v374
    %vm496 = vcmp.lt.f32.partialorder %v495, 0.0004427343
    %v497 = vsel %vm496, %v494, %v491
    %v498 = vadd.f32 %v376, 1.0
    %v499 = vlog2.pop %v498
    %v500 = vmul.f32 %v499, 0.6931472
    %v501 = vmul.f32 -0.5, %v376
    %v502 = vadd.f32 %v501, 1.0
    %v503 = vmul.f32 %v502, %v376
    %v504 = vand.u32 2147483647, %v376
    %vm505 = vcmp.lt.f32.partialorder %v504, 0.0004427343
    %v506 = vsel %vm505, %v503, %v500
    %v507 = vadd.f32 %v378, 1.0
    %v508 = vlog2.pop %v507
    %v509 = vmul.f32 %v508, 0.6931472
    %v510 = vmul.f32 -0.5, %v378
    %v511 = vadd.f32 %v510, 1.0
    %v512 = vmul.f32 %v511, %v378
    %v513 = vand.u32 2147483647, %v378
    %vm514 = vcmp.lt.f32.partialorder %v513, 0.0004427343
    %v515 = vsel %vm514, %v512, %v509
    %v516 = vadd.f32 %v380, 1.0
    %v517 = vlog2.pop %v516
    %v518 = vmul.f32 %v517, 0.6931472
    %v519 = vmul.f32 -0.5, %v380
    %v520 = vadd.f32 %v519, 1.0
    %v521 = vmul.f32 %v520, %v380
    %v522 = vand.u32 2147483647, %v380
    %vm523 = vcmp.lt.f32.partialorder %v522, 0.0004427343
    %v524 = vsel %vm523, %v521, %v518
    %v525 = vsel %vm317, %v301, %v389
    %v526 = vsel %vm318, %v302, %v398
    %v527 = vsel %vm319, %v303, %v407
    %v528 = vsel %vm320, %v304, %v416
    %v529 = vsel %vm321, %v305, %v425
    %v530 = vsel %vm322, %v306, %v434
    %v531 = vsel %vm323, %v307, %v443
    %v532 = vsel %vm324, %v308, %v452
    %v533 = vsel %vm325, %v309, %v461
    %v534 = vsel %vm326, %v310, %v470
    %v535 = vsel %vm327, %v311, %v479
    %v536 = vsel %vm328, %v312, %v488
    %v537 = vsel %vm329, %v313, %v497
    %v538 = vsel %vm330, %v314, %v506
    %v539 = vsel %vm331, %v315, %v515
    %v540 = vsel %vm332, %v316, %v524
    %v541 = vsub.f32 0.0, %v525
    %v542 = vsub.f32 0.0, %v526
    %v543 = vsub.f32 0.0, %v527
    %v544 = vsub.f32 0.0, %v528
    %v545 = vsub.f32 0.0, %v529
    %v546 = vsub.f32 0.0, %v530
    %v547 = vsub.f32 0.0, %v531
    %v548 = vsub.f32 0.0, %v532
    %v549 = vsub.f32 0.0, %v533
    %v550 = vsub.f32 0.0, %v534
    %v551 = vsub.f32 0.0, %v535
    %v552 = vsub.f32 0.0, %v536
    %v553 = vsub.f32 0.0, %v537
    %v554 = vsub.f32 0.0, %v538
    %v555 = vsub.f32 0.0, %v539
    %v556 = vsub.f32 0.0, %v540
    %v557 = vmul.f32 %v541, 1.442695
    %v558 = vpow.pop %v557
    %v559 = vmul.f32 %v542, 1.442695
    %v560 = vpow.pop %v559
    %v561 = vmul.f32 %v543, 1.442695
    %v562 = vpow.pop %v561
    %v563 = vmul.f32 %v544, 1.442695
    %v564 = vpow.pop %v563
    %v565 = vmul.f32 %v545, 1.442695
    %v566 = vpow.pop %v565
    %v567 = vmul.f32 %v546, 1.442695
    %v568 = vpow.pop %v567
    %v569 = vmul.f32 %v547, 1.442695
    %v570 = vpow.pop %v569
    %v571 = vmul.f32 %v548, 1.442695
    %v572 = vpow.pop %v571
    %v573 = vmul.f32 %v549, 1.442695
    %v574 = vpow.pop %v573
    %v575 = vmul.f32 %v550, 1.442695
    %v576 = vpow.pop %v575
    %v577 = vmul.f32 %v551, 1.442695
    %v578 = vpow.pop %v577
    %v579 = vmul.f32 %v552, 1.442695
    %v580 = vpow.pop %v579
    %v581 = vmul.f32 %v553, 1.442695
    %v582 = vpow.pop %v581
    %v583 = vmul.f32 %v554, 1.442695
    %v584 = vpow.pop %v583
    %v585 = vmul.f32 %v555, 1.442695
    %v586 = vpow.pop %v585
    %v587 = vmul.f32 %v556, 1.442695
    %v588 = vpow.pop %v587
    %v589 = vsub.f32 %v301, %v525
    %v590 = vsub.f32 %v302, %v526
    %v591 = vsub.f32 %v303, %v527
    %v592 = vsub.f32 %v304, %v528
    %v593 = vsub.f32 %v305, %v529
    %v594 = vsub.f32 %v306, %v530
    %v595 = vsub.f32 %v307, %v531
    %v596 = vsub.f32 %v308, %v532
    %v597 = vsub.f32 %v309, %v533
    %v598 = vsub.f32 %v310, %v534
    %v599 = vsub.f32 %v311, %v535
    %v600 = vsub.f32 %v312, %v536
    %v601 = vsub.f32 %v313, %v537
    %v602 = vsub.f32 %v314, %v538
    %v603 = vsub.f32 %v315, %v539
    %v604 = vsub.f32 %v316, %v540
    %v605 = vlog2.pop %v285
    %v606 = vmul.f32 %v605, 0.6931472
    %v607 = vlog2.pop %v286
    %v608 = vmul.f32 %v607, 0.6931472
    %v609 = vlog2.pop %v287
    %v610 = vmul.f32 %v609, 0.6931472
    %v611 = vlog2.pop %v288
    %v612 = vmul.f32 %v611, 0.6931472
    %v613 = vlog2.pop %v289
    %v614 = vmul.f32 %v613, 0.6931472
    %v615 = vlog2.pop %v290
    %v616 = vmul.f32 %v615, 0.6931472
    %v617 = vlog2.pop %v291
    %v618 = vmul.f32 %v617, 0.6931472
    %v619 = vlog2.pop %v292
    %v620 = vmul.f32 %v619, 0.6931472
    %v621 = vlog2.pop %v293
    %v622 = vmul.f32 %v621, 0.6931472
    %v623 = vlog2.pop %v294
    %v624 = vmul.f32 %v623, 0.6931472
    %v625 = vlog2.pop %v295
    %v626 = vmul.f32 %v625, 0.6931472
    %v627 = vlog2.pop %v296
    %v628 = vmul.f32 %v627, 0.6931472
    %v629 = vlog2.pop %v297
    %v630 = vmul.f32 %v629, 0.6931472
    %v631 = vlog2.pop %v298
    %v632 = vmul.f32 %v631, 0.6931472
    %v633 = vlog2.pop %v299
    %v634 = vmul.f32 %v633, 0.6931472
    %v635 = vlog2.pop %v300
    %v636 = vmul.f32 %v635, 0.6931472
    %v637 = vsub.f32 0.0, %v606
    %v638 = vsub.f32 0.0, %v608
    %v639 = vsub.f32 0.0, %v610
    %v640 = vsub.f32 0.0, %v612
    %v641 = vsub.f32 0.0, %v614
    %v642 = vsub.f32 0.0, %v616
    %v643 = vsub.f32 0.0, %v618
    %v644 = vsub.f32 0.0, %v620
    %v645 = vsub.f32 0.0, %v622
    %v646 = vsub.f32 0.0, %v624
    %v647 = vsub.f32 0.0, %v626
    %v648 = vsub.f32 0.0, %v628
    %v649 = vsub.f32 0.0, %v630
    %v650 = vsub.f32 0.0, %v632
    %v651 = vsub.f32 0.0, %v634
    %v652 = vsub.f32 0.0, %v636
    %v653 = vsub.f32 %v637, 0.5
    %v654 = vsub.f32 %v638, 0.5
    %v655 = vsub.f32 %v639, 0.5
    %v656 = vsub.f32 %v640, 0.5
    %v657 = vsub.f32 %v641, 0.5
    %v658 = vsub.f32 %v642, 0.5
    %v659 = vsub.f32 %v643, 0.5
    %v660 = vsub.f32 %v644, 0.5
    %v661 = vsub.f32 %v645, 0.5
    %v662 = vsub.f32 %v646, 0.5
    %v663 = vsub.f32 %v647, 0.5
    %v664 = vsub.f32 %v648, 0.5
    %v665 = vsub.f32 %v649, 0.5
    %v666 = vsub.f32 %v650, 0.5
    %v667 = vsub.f32 %v651, 0.5
    %v668 = vsub.f32 %v652, 0.5
    %v669 = vsub.f32 %v541, -2.3025851
    %v670 = vsub.f32 %v542, -2.3025851
    %v671 = vsub.f32 %v543, -2.3025851
    %v672 = vsub.f32 %v544, -2.3025851
    %v673 = vsub.f32 %v545, -2.3025851
    %v674 = vsub.f32 %v546, -2.3025851
    %v675 = vsub.f32 %v547, -2.3025851
    %v676 = vsub.f32 %v548, -2.3025851
    %v677 = vsub.f32 %v549, -2.3025851
    %v678 = vsub.f32 %v550, -2.3025851
    %v679 = vsub.f32 %v551, -2.3025851
    %v680 = vsub.f32 %v552, -2.3025851
    %v681 = vsub.f32 %v553, -2.3025851
    %v682 = vsub.f32 %v554, -2.3025851
    %v683 = vsub.f32 %v555, -2.3025851
    %v684 = vsub.f32 %v556, -2.3025851
    %v685 = vadd.f32 %v653, %v669
    %v686 = vadd.f32 %v654, %v670
    %v687 = vadd.f32 %v655, %v671
    %v688 = vadd.f32 %v656, %v672
    %v689 = vadd.f32 %v657, %v673
    %v690 = vadd.f32 %v658, %v674
    %v691 = vadd.f32 %v659, %v675
    %v692 = vadd.f32 %v660, %v676
    %v693 = vadd.f32 %v661, %v677
    %v694 = vadd.f32 %v662, %v678
    %v695 = vadd.f32 %v663, %v679
    %v696 = vadd.f32 %v664, %v680
    %v697 = vadd.f32 %v665, %v681
    %v698 = vadd.f32 %v666, %v682
    %v699 = vadd.f32 %v667, %v683
    %v700 = vadd.f32 %v668, %v684
    %v701 = vmul.f32 %v285, %v285
    %v702 = vmul.f32 %v286, %v286
    %v703 = vmul.f32 %v287, %v287
    %v704 = vmul.f32 %v288, %v288
    %v705 = vmul.f32 %v289, %v289
    %v706 = vmul.f32 %v290, %v290
    %v707 = vmul.f32 %v291, %v291
    %v708 = vmul.f32 %v292, %v292
    %v709 = vmul.f32 %v293, %v293
    %v710 = vmul.f32 %v294, %v294
    %v711 = vmul.f32 %v295, %v295
    %v712 = vmul.f32 %v296, %v296
    %v713 = vmul.f32 %v297, %v297
    %v714 = vmul.f32 %v298, %v298
    %v715 = vmul.f32 %v299, %v299
    %v716 = vmul.f32 %v300, %v300
    %v717 = vmul.f32 %v29, %v29
    %v718 = vmul.f32 %v30, %v30
    %v719 = vmul.f32 %v31, %v31
    %v720 = vmul.f32 %v32, %v32
    %v721 = vmul.f32 %v33, %v33
    %v722 = vmul.f32 %v34, %v34
    %v723 = vmul.f32 %v35, %v35
    %v724 = vmul.f32 %v36, %v36
    %v725 = vmul.f32 %v37, %v37
    %v726 = vmul.f32 %v38, %v38
    %v727 = vmul.f32 %v39, %v39
    %v728 = vmul.f32 %v40, %v40
    %v729 = vmul.f32 %v41, %v41
    %v730 = vmul.f32 %v42, %v42
    %v731 = vmul.f32 %v43, %v43
    %v732 = vmul.f32 %v44, %v44
    %v733 = vadd.f32 %v701, %v717
    %v734 = vadd.f32 %v702, %v718
    %v735 = vadd.f32 %v703, %v719
    %v736 = vadd.f32 %v704, %v720
    %v737 = vadd.f32 %v705, %v721
    %v738 = vadd.f32 %v706, %v722
    %v739 = vadd.f32 %v707, %v723
    %v740 = vadd.f32 %v708, %v724
    %v741 = vadd.f32 %v709, %v725
    %v742 = vadd.f32 %v710, %v726
    %v743 = vadd.f32 %v711, %v727
    %v744 = vadd.f32 %v712, %v728
    %v745 = vadd.f32 %v713, %v729
    %v746 = vadd.f32 %v714, %v730
    %v747 = vadd.f32 %v715, %v731
    %v748 = vadd.f32 %v716, %v732
    %v749 = vmul.f32 %v733, 0.5
    %v750 = vmul.f32 %v734, 0.5
    %v751 = vmul.f32 %v735, 0.5
    %v752 = vmul.f32 %v736, 0.5
    %v753 = vmul.f32 %v737, 0.5
    %v754 = vmul.f32 %v738, 0.5
    %v755 = vmul.f32 %v739, 0.5
    %v756 = vmul.f32 %v740, 0.5
    %v757 = vmul.f32 %v741, 0.5
    %v758 = vmul.f32 %v742, 0.5
    %v759 = vmul.f32 %v743, 0.5
    %v760 = vmul.f32 %v744, 0.5
    %v761 = vmul.f32 %v745, 0.5
    %v762 = vmul.f32 %v746, 0.5
    %v763 = vmul.f32 %v747, 0.5
    %v764 = vmul.f32 %v748, 0.5
    %v765 = vadd.f32 %v685, %v749
    %v766 = vadd.f32 %v686, %v750
    %v767 = vadd.f32 %v687, %v751
    %v768 = vadd.f32 %v688, %v752
    %v769 = vadd.f32 %v689, %v753
    %v770 = vadd.f32 %v690, %v754
    %v771 = vadd.f32 %v691, %v755
    %v772 = vadd.f32 %v692, %v756
    %v773 = vadd.f32 %v693, %v757
    %v774 = vadd.f32 %v694, %v758
    %v775 = vadd.f32 %v695, %v759
    %v776 = vadd.f32 %v696, %v760
    %v777 = vadd.f32 %v697, %v761
    %v778 = vadd.f32 %v698, %v762
    %v779 = vadd.f32 %v699, %v763
    %v780 = vadd.f32 %v700, %v764
    %v781 = vmul.f32 %v558, %v765
    %v782 = vmul.f32 %v560, %v766
    %v783 = vmul.f32 %v562, %v767
    %v784 = vmul.f32 %v564, %v768
    %v785 = vmul.f32 %v566, %v769
    %v786 = vmul.f32 %v568, %v770
    %v787 = vmul.f32 %v570, %v771
    %v788 = vmul.f32 %v572, %v772
    %v789 = vmul.f32 %v574, %v773
    %v790 = vmul.f32 %v576, %v774
    %v791 = vmul.f32 %v578, %v775
    %v792 = vmul.f32 %v580, %v776
    %v793 = vmul.f32 %v582, %v777
    %v794 = vmul.f32 %v584, %v778
    %v795 = vmul.f32 %v586, %v779
    %v796 = vmul.f32 %v588, %v780
    %v797 = vsub.f32 1.0, %v558
    %v798 = vsub.f32 1.0, %v560
    %v799 = vsub.f32 1.0, %v562
    %v800 = vsub.f32 1.0, %v564
    %v801 = vsub.f32 1.0, %v566
    %v802 = vsub.f32 1.0, %v568
    %v803 = vsub.f32 1.0, %v570
    %v804 = vsub.f32 1.0, %v572
    %v805 = vsub.f32 1.0, %v574
    %v806 = vsub.f32 1.0, %v576
    %v807 = vsub.f32 1.0, %v578
    %v808 = vsub.f32 1.0, %v580
    %v809 = vsub.f32 1.0, %v582
    %v810 = vsub.f32 1.0, %v584
    %v811 = vsub.f32 1.0, %v586
    %v812 = vsub.f32 1.0, %v588
    %v813 = vsub.f32 %v589, -0.105360515
    %v814 = vsub.f32 %v590, -0.105360515
    %v815 = vsub.f32 %v591, -0.105360515
    %v816 = vsub.f32 %v592, -0.105360515
    %v817 = vsub.f32 %v593, -0.105360515
    %v818 = vsub.f32 %v594, -0.105360515
    %v819 = vsub.f32 %v595, -0.105360515
    %v820 = vsub.f32 %v596, -0.105360515
    %v821 = vsub.f32 %v597, -0.105360515
    %v822 = vsub.f32 %v598, -0.105360515
    %v823 = vsub.f32 %v599, -0.105360515
    %v824 = vsub.f32 %v600, -0.105360515
    %v825 = vsub.f32 %v601, -0.105360515
    %v826 = vsub.f32 %v602, -0.105360515
    %v827 = vsub.f32 %v603, -0.105360515
    %v828 = vsub.f32 %v604, -0.105360515
    %v829 = vmul.f32 %v797, %v813
    %v830 = vmul.f32 %v798, %v814
    %v831 = vmul.f32 %v799, %v815
    %v832 = vmul.f32 %v800, %v816
    %v833 = vmul.f32 %v801, %v817
    %v834 = vmul.f32 %v802, %v818
    %v835 = vmul.f32 %v803, %v819
    %v836 = vmul.f32 %v804, %v820
    %v837 = vmul.f32 %v805, %v821
    %v838 = vmul.f32 %v806, %v822
    %v839 = vmul.f32 %v807, %v823
    %v840 = vmul.f32 %v808, %v824
    %v841 = vmul.f32 %v809, %v825
    %v842 = vmul.f32 %v810, %v826
    %v843 = vmul.f32 %v811, %v827
    %v844 = vmul.f32 %v812, %v828
    %v845 = vadd.f32 %v781, %v829
    %v846 = vadd.f32 %v782, %v830
    %v847 = vadd.f32 %v783, %v831
    %v848 = vadd.f32 %v784, %v832
    %v849 = vadd.f32 %v785, %v833
    %v850 = vadd.f32 %v786, %v834
    %v851 = vadd.f32 %v787, %v835
    %v852 = vadd.f32 %v788, %v836
    %v853 = vadd.f32 %v789, %v837
    %v854 = vadd.f32 %v790, %v838
    %v855 = vadd.f32 %v791, %v839
    %v856 = vadd.f32 %v792, %v840
    %v857 = vadd.f32 %v793, %v841
    %v858 = vadd.f32 %v794, %v842
    %v859 = vadd.f32 %v795, %v843
    %v860 = vadd.f32 %v796, %v844
    %v861 = vlaneseq
    %v862 = vshrl.u32 %v861, 7
    %v863 = vadd.s32 %v862, 8
    %v864 = vadd.s32 %v862, 16
    %v865 = vadd.s32 %v862, 24
    %v866 = vadd.s32 %v862, 32
    %v867 = vadd.s32 %v862, 40
    %v868 = vadd.s32 %v862, 48
    %v869 = vadd.s32 %v862, 56
    %v870 = vadd.s32 %v862, 64
    %v871 = vadd.s32 %v862, 72
    %v872 = vadd.s32 %v862, 80
    %v873 = vadd.s32 %v862, 88
    %v874 = vadd.s32 %v862, 96
    %v875 = vadd.s32 %v862, 104
    %v876 = vadd.s32 %v862, 112
    %v877 = vadd.s32 %v862, 120
    %s878 = smul.u32 0, 128
    %v879 = vstv %s878
    %v880 = vadd.s32 %v862, %v879
    %v881 = vadd.s32 %v863, %v879
    %v882 = vadd.s32 %v864, %v879
    %v883 = vadd.s32 %v865, %v879
    %v884 = vadd.s32 %v866, %v879
    %v885 = vadd.s32 %v867, %v879
    %v886 = vadd.s32 %v868, %v879
    %v887 = vadd.s32 %v869, %v879
    %v888 = vadd.s32 %v870, %v879
    %v889 = vadd.s32 %v871, %v879
    %v890 = vadd.s32 %v872, %v879
    %v891 = vadd.s32 %v873, %v879
    %v892 = vadd.s32 %v874, %v879
    %v893 = vadd.s32 %v875, %v879
    %v894 = vadd.s32 %v876, %v879
    %v895 = vadd.s32 %v877, %v879
    %v896 = vlaneseq
    %v897 = vand.u32 %v896, 127
    %s898 = smul.u32 0, 128
    %v899 = vstv %s898
    %v900 = vadd.s32 %v897, %v899
    %vm901 = vcmp.lt.s32.totalorder %v880, 16
    %vm902 = vcmp.lt.s32.totalorder %v881, 16
    %vm903 = vcmp.lt.s32.totalorder %v882, 16
    %vm904 = vcmp.lt.s32.totalorder %v883, 16
    %vm905 = vcmp.lt.s32.totalorder %v884, 16
    %vm906 = vcmp.lt.s32.totalorder %v885, 16
    %vm907 = vcmp.lt.s32.totalorder %v886, 16
    %vm908 = vcmp.lt.s32.totalorder %v887, 16
    %vm909 = vcmp.lt.s32.totalorder %v888, 16
    %vm910 = vcmp.lt.s32.totalorder %v889, 16
    %vm911 = vcmp.lt.s32.totalorder %v890, 16
    %vm912 = vcmp.lt.s32.totalorder %v891, 16
    %vm913 = vcmp.lt.s32.totalorder %v892, 16
    %vm914 = vcmp.lt.s32.totalorder %v893, 16
    %vm915 = vcmp.lt.s32.totalorder %v894, 16
    %vm916 = vcmp.lt.s32.totalorder %v895, 16
    %vm917 = vcmp.lt.s32.totalorder %v900, 32
    %vm918 = vmand %vm901, %vm917
    %vm919 = vmand %vm902, %vm917
    %vm920 = vmand %vm903, %vm917
    %vm921 = vmand %vm904, %vm917
    %vm922 = vmand %vm905, %vm917
    %vm923 = vmand %vm906, %vm917
    %vm924 = vmand %vm907, %vm917
    %vm925 = vmand %vm908, %vm917
    %vm926 = vmand %vm909, %vm917
    %vm927 = vmand %vm910, %vm917
    %vm928 = vmand %vm911, %vm917
    %vm929 = vmand %vm912, %vm917
    %vm930 = vmand %vm913, %vm917
    %vm931 = vmand %vm914, %vm917
    %vm932 = vmand %vm915, %vm917
    %vm933 = vmand %vm916, %vm917
    %v934 = vld [vmem:[#allocation2] sm:$0x1]
    %v935 = vsel %vm918, %v845, 0.0
    %v936 = vsel %vm919, %v846, 0.0
    %v937 = vsel %vm920, %v847, 0.0
    %v938 = vsel %vm921, %v848, 0.0
    %v939 = vsel %vm922, %v849, 0.0
    %v940 = vsel %vm923, %v850, 0.0
    %v941 = vsel %vm924, %v851, 0.0
    %v942 = vsel %vm925, %v852, 0.0
    %v943 = vsel %vm926, %v853, 0.0
    %v944 = vsel %vm927, %v854, 0.0
    %v945 = vsel %vm928, %v855, 0.0
    %v946 = vsel %vm929, %v856, 0.0
    %v947 = vsel %vm930, %v857, 0.0
    %v948 = vsel %vm931, %v858, 0.0
    %v949 = vsel %vm932, %v859, 0.0
    %v950 = vsel %vm933, %v860, 0.0
    %v951 = vadd.f32 %v935, %v936
    %v952 = vadd.f32 %v951, %v937
    %v953 = vadd.f32 %v952, %v938
    %v954 = vadd.f32 %v953, %v939
    %v955 = vadd.f32 %v954, %v940
    %v956 = vadd.f32 %v955, %v941
    %v957 = vadd.f32 %v956, %v942
    %v958 = vadd.f32 %v957, %v943
    %v959 = vadd.f32 %v958, %v944
    %v960 = vadd.f32 %v959, %v945
    %v961 = vadd.f32 %v960, %v946
    %v962 = vadd.f32 %v961, %v947
    %v963 = vadd.f32 %v962, %v948
    %v964 = vadd.f32 %v963, %v949
    %v965 = vadd.f32 %v964, %v950
    %966 = vadd.xlane.f32.xlu0 %v965
    %v967 = vpop.xlane.xlu0 %966
    %v968 = vrot.slane %v967, 4
    %v969 = vadd.f32 %v967, %v968
    %v970 = vrot.slane %v969, 2
    %v971 = vadd.f32 %v969, %v970
    %v972 = vrot.slane %v971, 1
    %v973 = vadd.f32 %v971, %v972
    %s974 = vtos %v973
    %v975 = vstv %s974
    %v976 = vadd.f32 %v934, %v975
    %vm977 = vcmask 0
    %978 = vst.msk [vmem:[#allocation2] sm:$0x1] %vm977, %v976
    // Predicated region
    $region26: #{bayesian_linear_forward.3} parent=1 // pred_check
      %p979 = pneg %p22
    $region27: #{bayesian_linear_forward.3} parent=1 // pred_check_branch
      %981 = sbr.rel (%p979) target = $region29
    $region28: #{bayesian_linear_forward.3} parent=1 // pred_region
      %v982 = vld [vmem:[%s3] sm:$0x1]
      %v983 = vld [vmem:[%s4] sm:$0x1]
      %vm984 = vcmp.gt.f32.partialorder %v983, 20.0
      %v985 = vmin.f32 %v983, 20.0
      %v986 = vmul.f32 %v985, 1.442695
      %v987 = vpow.pop %v986
      %v988 = vadd.f32 %v987, 1.0
      %v989 = vlog2.pop %v988
      %v990 = vmul.f32 %v989, 0.6931472
      %v991 = vmul.f32 -0.5, %v987
      %v992 = vadd.f32 %v991, 1.0
      %v993 = vmul.f32 %v992, %v987
      %v994 = vand.u32 2147483647, %v987
      %vm995 = vcmp.lt.f32.partialorder %v994, 0.0004427343
      %v996 = vsel %vm995, %v993, %v990
      %v997 = vsel %vm984, %v983, %v996
      %v998 = vlog2.pop %v997
      %v999 = vmul.f32 %v998, 0.6931472
      %v1000 = vsub.f32 0.0, %v999
      %v1001 = vsub.f32 %v1000, 0.5
      %v1002 = vmul.f32 %v997, %v997
      %v1003 = vmul.f32 %v982, %v982
      %v1004 = vadd.f32 %v1002, %v1003
      %v1005 = vmul.f32 %v1004, 0.5
      %v1006 = vadd.f32 %v1001, %v1005
      %v1007 = vadd.s32 %v897, %v879
      %v1008 = vld [vmem:[#allocation2] sm:$0x1]
      %vm1009 = vcmp.lt.s32.totalorder %v1007, 16
      %v1010 = vsel %vm1009, %v1006, 0.0
      %vm1011 = vcmask 1040384
      %v1012 = vsel %vm1011, %v1010, 0.0
      %1013 = vadd.xlane.f32.xlu0 %v1012
      %v1014 = vpop.xlane.xlu0 %1013
      %v1015 = vrot.slane %v1014, 4
      %v1016 = vadd.f32 %v1014, %v1015
      %v1017 = vrot.slane %v1016, 2
      %v1018 = vadd.f32 %v1016, %v1017
      %v1019 = vrot.slane %v1018, 1
      %v1020 = vadd.f32 %v1018, %v1019
      %s1021 = vtos %v1020
      %v1022 = vstv %s1021
      %v1023 = vadd.f32 %v1008, %v1022
      %1024 = vst.msk [vmem:[#allocation2] sm:$0x1] %vm977, %v1023
    $region29: #{bayesian_linear_forward.3} parent=1 // pred_fallthru
      _
    // Predicated region
    $region30: #{bayesian_linear_forward.3} parent=1 // pred_check
      _
    $region31: #{bayesian_linear_forward.3} parent=1 // pred_check_branch
      %1026 = sbr.rel (0) target = $region33
    $region32: #{bayesian_linear_forward.3} parent=1 // pred_region
      %s1028 = ssub.s32 16, 16
      %1029 = vsyncadd [#allocation3], %s1028
      %s1031 = sshll.u32 [#allocation2], 4
      %s1032 = int_to_ptr.vmem [resolvable:$true] %s1031
      %1034 = dma.vmem_to_hbm [thread:$0]  %s1032, 16, %s5, [#allocation3]
    $region33: #{bayesian_linear_forward.3} parent=1 // pred_fallthru
      _
    // Predicated region
    $region34: #{bayesian_linear_forward.3} parent=1 // pred_check
      _
    $region35: #{bayesian_linear_forward.3} parent=1 // pred_check_branch
      %1036 = sbr.rel (0) target = $region37
    $region36: #{bayesian_linear_forward.3} parent=1 // pred_region
      %1037 = dma.done [#allocation3], 16
    $region37: #{bayesian_linear_forward.3} parent=1 // pred_fallthru
      _
    %1038 = vsyncpa [#allocation3], 1

</llo_original>
